<compile_context>
chip_gen: v7x
topology: tpu7x:2x2x1
jax: 0.10.0
libtpu: 0.0.40
codegen_flags: <defaults>
</compile_context>

<pallas_src>
import functools
import math

import jax
import jax.numpy as jnp
from jax import lax
from jax.experimental import pallas as pl
from jax.experimental.pallas import tpu as pltpu


def _projector_kernel(feat_ref, tok_ref, wvk_ref, bvk_ref, wq_ref, bq_ref,
                      out_ref, vk_ref, pq_ref, *, head, groups, bn, hw_cols, L):
    """One grid step == `bn` batch elements x `hw_cols` spatial positions.

    feat_ref: (1, C, bn*hw_cols)  compute-dtype feature slab (batch folded into lanes)
    tok_ref:  (1, CT, bn*L)       compute-dtype token slab (constant across hw tiles)
    wvk_ref:  (2C, CT)            fused [value; key] 1x1-conv weight (compute dtype)
    bvk_ref:  (2C, 1)             fused [value; key] bias (f32)
    wq_ref:   (groups, CT//g, C//g) grouped 1x1-conv weight, attention scale pre-folded
    bq_ref:   (CT, 1)             query bias, scale pre-folded (f32)
    out_ref:  (1, C, bn*hw_cols)  f32 residual output
    vk_ref:   VMEM scratch (2C, bn*L)       value/key projection (hoisted across hw tiles)
    pq_ref:   VMEM scratch (CT, bn*hw_cols) scaled query projection
    """
    C = vk_ref.shape[0] // 2
    CT = pq_ref.shape[0]
    dc = C // head          # per-head value / key dim
    dq = CT // head         # per-head query dim (== dc, asserted in wrapper)
    cin = C // groups
    cout = CT // groups
    cdt = vk_ref.dtype

    # Value/key projection is independent of the hw tile: compute it once per
    # batch tile (inner grid axis == 0) and keep it resident in VMEM scratch.
    @pl.when(pl.program_id(1) == 0)
    def _():
        vk = jnp.dot(wvk_ref[...], tok_ref[0],
                     preferred_element_type=jnp.float32) + bvk_ref[...]   # (2C, bn*L)
        vk_ref[...] = vk.astype(cdt)

    # Grouped query 1x1 conv (scale & bias pre-folded in the wrapper).  Per-group
    # matmuls avoid the groups-x redundant FLOPs of a dense block-diagonal weight;
    # results land in a VMEM scratch so per-head reads are cheap static slices.
    for g in range(groups):
        pq_g = jnp.dot(wq_ref[g], feat_ref[0, g * cin:(g + 1) * cin, :],
                       preferred_element_type=jnp.float32)                # (cout, cols)
        pq_g = pq_g + bq_ref[g * cout:(g + 1) * cout, :]
        pq_ref[g * cout:(g + 1) * cout, :] = pq_g.astype(cdt)

    # Attention per (batch-in-tile, head).  Scores live in (L, hw) layout so the
    # elementwise softmax work is lane-dense and the reduction is a sublane
    # reduce; each (n, h) result is stored immediately (no concatenation).
    dn = (((0,), (0,)), ((), ()))   # contract dim 0 of both operands (no transposes)
    for n in range(bn):
        c0 = n * hw_cols
        for h in range(head):
            qh = pq_ref[h * dq:(h + 1) * dq, c0:c0 + hw_cols]               # (dq, hw)
            kh = vk_ref[C + h * dc:C + (h + 1) * dc, n * L:(n + 1) * L]     # (dc, L)
            vh = vk_ref[h * dc:(h + 1) * dc, n * L:(n + 1) * L]             # (dc, L)

            s = lax.dot_general(kh, qh, dn,
                                preferred_element_type=jnp.float32)        # (L, hw)
            s = s - jnp.max(s, axis=0, keepdims=True)
            e = jnp.exp(s)
            coef = e * pl.reciprocal(jnp.sum(e, axis=0, keepdims=True), approx=True)

            proj = jnp.dot(vh, coef.astype(cdt),
                           preferred_element_type=jnp.float32)             # (dc, hw)
            res = feat_ref[0, h * dc:(h + 1) * dc, c0:c0 + hw_cols].astype(jnp.float32) + proj
            out_ref[0, h * dc:(h + 1) * dc, c0:c0 + hw_cols] = res.astype(out_ref.dtype)


def _pick_hw_tile(HW, max_tile=512):
    """Largest multiple-of-128 divisor of HW that is <= max_tile, else HW (full)."""
    if HW <= max_tile or HW % 128 != 0:
        return HW
    for t in range(max_tile - max_tile % 128, 127, -128):
        if HW % t == 0:
            return t
    return HW


def init_params(key, CT, C, groups):
    ks = jax.random.split(key, 6)
    scale = 0.1
    return {
        "wv": scale * jax.random.normal(ks[0], (C, CT), jnp.float32),
        "bv": scale * jax.random.normal(ks[1], (C,), jnp.float32),
        "wk": scale * jax.random.normal(ks[2], (C, CT), jnp.float32),
        "bk": scale * jax.random.normal(ks[3], (C,), jnp.float32),
        # grouped conv weight, torch shape (CT, C//groups, 1, 1) -> (CT, C//groups)
        "wq": scale * jax.random.normal(ks[4], (CT, C // groups), jnp.float32),
        "bq": scale * jax.random.normal(ks[5], (CT,), jnp.float32),
    }


def projector_forward(feature, token, params, *, head, groups,
                      compute_dtype=jnp.bfloat16, hw_tile=None, batch_fold=1):
    N, C, H, W = feature.shape
    _, L, CT = token.shape
    HW = H * W
    assert C % head == 0 and CT % head == 0, "head must divide C and CT"
    assert C // head == CT // head, "per-head q/k dims must match (torch requires CT == C)"
    assert C % groups == 0 and CT % groups == 0, "groups must divide C and CT"

    cdt = jnp.dtype(compute_dtype)

    # torch's token.view(N, CT, L): pure reinterpretation of the contiguous
    # (N, L, CT) buffer, NOT a permute.
    tok_t = token.reshape(N, CT, L)

    # Spatial tiling (inner, "arbitrary" grid axis) in multiples of 128 lanes.
    if hw_tile is None:
        hw_tile = _pick_hw_tile(HW)
    assert HW % hw_tile == 0, "hw_tile must divide H*W"
    n_hw = HW // hw_tile

    # Optional batch fold into the lane axis (useful when HW < 128 so projection
    # matmuls/stores still see a lane-dense slab).  Folding and hw-tiling are
    # mutually exclusive (a tile must stay inside one batch element).
    bn = max(1, batch_fold)
    assert N % bn == 0, "batch_fold must divide N"
    if bn > 1:
        assert hw_tile == HW, "batch_fold > 1 requires hw_tile == H*W"
    B = N // bn

    # Wrapper-side (XLA) layout plumbing -> lane-dense slabs, no in-kernel copies.
    feat_f = (feature.reshape(B, bn, C, HW).transpose(0, 2, 1, 3)
              .reshape(B, C, bn * HW).astype(cdt))
    tok_f = (tok_t.reshape(B, bn, CT, L).transpose(0, 2, 1, 3)
             .reshape(B, CT, bn * L).astype(cdt))

    # Fold the attention scale 1/sqrt(CT/head) (torch rebinds C to proj_q's channel
    # count, i.e. CT) into the query weight & bias at trace time.
    scale = 1.0 / math.sqrt(CT / head)
    wq = (params["wq"].astype(jnp.float32) * scale).reshape(
        groups, CT // groups, C // groups).astype(cdt)
    bq = (params["bq"].astype(jnp.float32) * scale).reshape(CT, 1)

    # Fuse value & key 1x1-conv weights into a single MXU matmul operand.
    wvk = jnp.concatenate([params["wv"], params["wk"]], axis=0).astype(cdt)
    bvk = jnp.concatenate([params["bv"], params["bk"]], axis=0).astype(jnp.float32).reshape(2 * C, 1)

    cols = bn * hw_tile
    isz = cdt.itemsize

    # VMEM budget: double-buffered blocks + persistent scratches (+ margin).
    block_bytes = 2 * (C * cols * isz                 # feature block
                       + CT * bn * L * isz            # token block
                       + C * cols * 4                 # f32 output block
                       + 2 * C * CT * isz             # wvk
                       + CT * (C // groups) * isz     # wq
                       + (2 * C + CT) * 4)            # biases
    scratch_bytes = (2 * C * bn * L + CT * cols) * isz
    vmem_limit = int(min(max(2 * (block_bytes + scratch_bytes) + (2 << 20), 16 << 20),
                         100 << 20))

    cost = pl.CostEstimate(
        flops=2 * N * (2 * C * CT * L                        # value/key projection
                       + CT * (C // groups) * HW             # grouped query projection
                       + 2 * head * (C // head) * L * HW),   # scores + V@coef
        transcendentals=N * head * L * HW,
        bytes_accessed=int((N * C * HW + N * CT * L + 2 * C * CT
                            + CT * (C // groups)) * isz
                           + (2 * C + CT) * 4 + N * C * HW * 4),
    )

    kernel = functools.partial(_projector_kernel, head=head, groups=groups,
                               bn=bn, hw_cols=hw_tile, L=L)

    # TODO(synk): for v7x small-batch inference (B == 1), make the hw axis the
    # "parallel" one (dropping the hw==0 K/V hoist) so both TensorCores are used.
    out_f = pl.pallas_call(
        kernel,
        out_shape=jax.ShapeDtypeStruct((B, C, bn * HW), jnp.float32),
        grid_spec=pltpu.PrefetchScalarGridSpec(
            num_scalar_prefetch=0,
            grid=(B, n_hw),
            in_specs=[
                pl.BlockSpec((1, C, cols), lambda b, t: (b, 0, t)),
                pl.BlockSpec((1, CT, bn * L), lambda b, t: (b, 0, 0)),
                pl.BlockSpec((2 * C, CT), lambda b, t: (0, 0)),
                pl.BlockSpec((2 * C, 1), lambda b, t: (0, 0)),
                pl.BlockSpec((groups, CT // groups, C // groups), lambda b, t: (0, 0, 0)),
                pl.BlockSpec((CT, 1), lambda b, t: (0, 0)),
            ],
            out_specs=pl.BlockSpec((1, C, cols), lambda b, t: (b, 0, t)),
            scratch_shapes=[
                pltpu.VMEM((2 * C, bn * L), cdt),   # hoisted value/key projection
                pltpu.VMEM((CT, cols), cdt),        # scaled query projection
            ],
        ),
        compiler_params=pltpu.CompilerParams(
            dimension_semantics=("parallel", "arbitrary"),
            vmem_limit_bytes=vmem_limit),
        cost_estimate=cost,
    )(feat_f, tok_f, wvk, bvk, wq, bq)

    out = out_f.reshape(B, C, bn, HW).transpose(0, 2, 1, 3).reshape(N, C, H, W)
    return out, tok_t


def projector_reference(feature, token, params, *, head, groups):
    """Pure-JAX (f32) reference mirroring the PyTorch forward, for verification."""
    N, C, H, W = feature.shape
    _, L, CT = token.shape
    HW = H * W
    tok_t = token.reshape(N, CT, L)

    pv = jnp.einsum("ck,nkl->ncl", params["wv"], tok_t) + params["bv"][None, :, None]
    pk = jnp.einsum("ck,nkl->ncl", params["wk"], tok_t) + params["bk"][None, :, None]

    cin = C // groups
    cout = CT // groups
    feat_g = feature.reshape(N, groups, cin, HW)
    wq_g = params["wq"].reshape(groups, cout, cin)
    pq = jnp.einsum("goi,ngip->ngop", wq_g, feat_g).reshape(N, CT, HW)
    pq = pq + params["bq"][None, :, None]

    h = head
    q = pq.reshape(N, h, CT // h, HW).transpose(0, 1, 3, 2)      # (N, h, HW, CT//h)
    k = pk.reshape(N, h, C // h, L)                              # (N, h, C//h, L)
    v = pv.reshape(N, h, C // h, L)                              # (N, h, C//h, L)

    scores = jnp.einsum("nhpd,nhdl->nhpl", q, k) / jnp.sqrt(jnp.float32(CT / h))
    coef = jax.nn.softmax(scores, axis=3)
    proj = jnp.einsum("nhdl,nhpl->nhdp", v, coef)                # (N, h, C//h, HW)
    out = feature + proj.reshape(N, C, H, W)
    return out, tok_t


if __name__ == "__main__":
    key = jax.random.PRNGKey(0)
    head, groups = 4, 4
    C, CT, L = 32, 32, 8
    k_feat, k_tok, k_par, k_feat2 = jax.random.split(key, 4)
    params = init_params(k_par, CT, C, groups)

    # --- Small shapes: feature (2, 32, 8, 8), token (2, 8, 32). ---
    N, H, W = 2, 8, 8
    feature = jax.random.normal(k_feat, (N, C, H, W), jnp.float32)
    token = jax.random.normal(k_tok, (N, L, CT), jnp.float32)
    ref_feat, ref_tok = projector_reference(feature, token, params, head=head, groups=groups)

    # Default path: bf16 MXU operands, f32 accumulation, per-batch pipelined grid.
    out_feat, out_tok = projector_forward(feature, token, params, head=head, groups=groups)
    jax.block_until_ready(out_feat)
    assert jnp.array_equal(out_tok, ref_tok), "token mismatch"
    assert jnp.allclose(out_feat, ref_feat, atol=5e-2, rtol=5e-2), "bf16 path mismatch"

    # f32 operand path (tight parity; only the approx softmax reciprocal differs).
    out32, _ = projector_forward(feature, token, params, head=head, groups=groups,
                                 compute_dtype=jnp.float32)
    jax.block_until_ready(out32)
    assert jnp.allclose(out32, ref_feat, atol=2e-3, rtol=2e-3), "f32 path mismatch"

    # Batch-folded path (lane-dense slab when H*W < 128).
    outbf, _ = projector_forward(feature, token, params, head=head, groups=groups,
                                 batch_fold=2)
    jax.block_until_ready(outbf)
    assert jnp.allclose(outbf, ref_feat, atol=5e-2, rtol=5e-2), "batch_fold path mismatch"

    # --- Larger spatial extent exercises HW tiling + the hoisted K/V projection. ---
    N2, H2, W2 = 2, 16, 16
    feature2 = jax.random.normal(k_feat2, (N2, C, H2, W2), jnp.float32)
    token2 = jax.random.normal(k_tok, (N2, L, CT), jnp.float32)
    ref2, _ = projector_reference(feature2, token2, params, head=head, groups=groups)
    out2, _ = projector_forward(feature2, token2, params, head=head, groups=groups,
                                hw_tile=128)
    jax.block_until_ready(out2)
    assert jnp.allclose(out2, ref2, atol=5e-2, rtol=5e-2), "hw-tiled path mismatch"

    print("KERNEL_OK")
</pallas_src>

<mosaic_0001>
module attributes {stable_mosaic.version = 11 : i64} {
  func.func @_projector_kernel(%arg0: i32, %arg1: i32, %arg2: memref<1x32x64xbf16, #tpu.memory_space<vmem>>, %arg3: memref<1x32x8xbf16, #tpu.memory_space<vmem>>, %arg4: memref<64x32xbf16, #tpu.memory_space<vmem>>, %arg5: memref<64x1xf32, #tpu.memory_space<vmem>>, %arg6: memref<4x8x8xbf16, #tpu.memory_space<vmem>>, %arg7: memref<32x1xf32, #tpu.memory_space<vmem>>, %arg8: memref<1x32x64xf32, #tpu.memory_space<vmem>>, %arg9: memref<64x8xbf16, #tpu.memory_space<vmem>>, %arg10: memref<32x64xbf16, #tpu.memory_space<vmem>>) attributes {dimension_semantics = [#tpu.dimension_semantics<parallel>, #tpu.dimension_semantics<arbitrary>], iteration_bounds = array<i64: 2, 1>, scalar_prefetch = 0 : i64, scratch_operands = 2 : i64, tpu.core_type = #tpu.core_type<tc>, window_params = [{transform_indices = @transform_0, window_bounds = array<i64: 1, 32, 64>}, {transform_indices = @transform_1, window_bounds = array<i64: 1, 32, 8>}, {pipeline_mode = #tpu.pipeline_mode<synchronous>, transform_indices = @transform_2, window_bounds = array<i64: 64, 32>}, {pipeline_mode = #tpu.pipeline_mode<synchronous>, transform_indices = @transform_3, window_bounds = array<i64: 64, 1>}, {pipeline_mode = #tpu.pipeline_mode<synchronous>, transform_indices = @transform_4, window_bounds = array<i64: 4, 8, 8>}, {pipeline_mode = #tpu.pipeline_mode<synchronous>, transform_indices = @transform_5, window_bounds = array<i64: 32, 1>}, {transform_indices = @transform_6, window_bounds = array<i64: 1, 32, 64>}]} {
    %c0_i32 = arith.constant 0 : i32
    %0 = arith.cmpi eq, %arg1, %c0_i32 : i32
    %1 = arith.extui %0 : i1 to i32
    %c0_i32_0 = arith.constant 0 : i32
    %2 = arith.cmpi ne, %1, %c0_i32_0 : i32
    scf.if %2 {
      %c0_97 = arith.constant 0 : index
      %c0_98 = arith.constant 0 : index
      %135 = vector.load %arg4[%c0_97, %c0_98] : memref<64x32xbf16, #tpu.memory_space<vmem>>, vector<64x32xbf16>
      %c0_99 = arith.constant 0 : index
      %c0_100 = arith.constant 0 : index
      %c0_101 = arith.constant 0 : index
      %136 = vector.load %arg3[%c0_99, %c0_100, %c0_101] : memref<1x32x8xbf16, #tpu.memory_space<vmem>>, vector<1x32x8xbf16>
      %137 = vector.shape_cast %136 : vector<1x32x8xbf16> to vector<32x8xbf16>
      %cst_102 = arith.constant dense<0.000000e+00> : vector<64x8xf32>
      %138 = tpu.matmul %135, %137, %cst_102 {dimension_numbers = #tpu.dot_dimension_numbers<[1], [0], [0], [1], [0, 0, 1, 1], [], []>} : vector<64x32xbf16>, vector<32x8xbf16>, vector<64x8xf32> -> vector<64x8xf32>
      %c0_103 = arith.constant 0 : index
      %c0_104 = arith.constant 0 : index
      %139 = vector.load %arg5[%c0_103, %c0_104] : memref<64x1xf32, #tpu.memory_space<vmem>>, vector<64x1xf32>
      %140 = vector.broadcast %139 : vector<64x1xf32> to vector<64x8xf32>
      %141 = arith.addf %138, %140 : vector<64x8xf32>
      %142 = arith.truncf %141 : vector<64x8xf32> to vector<64x8xbf16>
      %c0_105 = arith.constant 0 : index
      %c0_106 = arith.constant 0 : index
      %143 = vector.load %arg9[%c0_105, %c0_106] : memref<64x8xbf16, #tpu.memory_space<vmem>>, vector<64x8xbf16>
      tpu.vector_store %arg9[%c0_105, %c0_106], %142 {strides = array<i32>} : memref<64x8xbf16, #tpu.memory_space<vmem>>, vector<64x8xbf16>,
    } else {
    }
    %c0 = arith.constant 0 : index
    %c0_1 = arith.constant 0 : index
    %c0_2 = arith.constant 0 : index
    %3 = vector.load %arg6[%c0, %c0_1, %c0_2] : memref<4x8x8xbf16, #tpu.memory_space<vmem>>, vector<1x8x8xbf16>
    %4 = vector.shape_cast %3 : vector<1x8x8xbf16> to vector<8x8xbf16>
    %c0_3 = arith.constant 0 : index
    %c0_4 = arith.constant 0 : index
    %c0_5 = arith.constant 0 : index
    %5 = vector.load %arg2[%c0_3, %c0_4, %c0_5] : memref<1x32x64xbf16, #tpu.memory_space<vmem>>, vector<1x8x64xbf16>
    %6 = vector.shape_cast %5 : vector<1x8x64xbf16> to vector<8x64xbf16>
    %cst = arith.constant dense<0.000000e+00> : vector<8x64xf32>
    %7 = tpu.matmul %4, %6, %cst {dimension_numbers = #tpu.dot_dimension_numbers<[1], [0], [0], [1], [0, 0, 1, 1], [], []>} : vector<8x8xbf16>, vector<8x64xbf16>, vector<8x64xf32> -> vector<8x64xf32>
    %c0_6 = arith.constant 0 : index
    %c0_7 = arith.constant 0 : index
    %8 = vector.load %arg7[%c0_6, %c0_7] : memref<32x1xf32, #tpu.memory_space<vmem>>, vector<8x1xf32>
    %9 = vector.broadcast %8 : vector<8x1xf32> to vector<8x64xf32>
    %10 = arith.addf %7, %9 : vector<8x64xf32>
    %11 = arith.truncf %10 : vector<8x64xf32> to vector<8x64xbf16>
    %c0_8 = arith.constant 0 : index
    %c0_9 = arith.constant 0 : index
    %12 = vector.load %arg10[%c0_8, %c0_9] : memref<32x64xbf16, #tpu.memory_space<vmem>>, vector<8x64xbf16>
    tpu.vector_store %arg10[%c0_8, %c0_9], %11 {strides = array<i32>} : memref<32x64xbf16, #tpu.memory_space<vmem>>, vector<8x64xbf16>,
    %c1 = arith.constant 1 : index
    %c0_10 = arith.constant 0 : index
    %c0_11 = arith.constant 0 : index
    %13 = vector.load %arg6[%c1, %c0_10, %c0_11] : memref<4x8x8xbf16, #tpu.memory_space<vmem>>, vector<1x8x8xbf16>
    %14 = vector.shape_cast %13 : vector<1x8x8xbf16> to vector<8x8xbf16>
    %c0_12 = arith.constant 0 : index
    %c8 = arith.constant 8 : index
    %c0_13 = arith.constant 0 : index
    %15 = vector.load %arg2[%c0_12, %c8, %c0_13] : memref<1x32x64xbf16, #tpu.memory_space<vmem>>, vector<1x8x64xbf16>
    %16 = vector.shape_cast %15 : vector<1x8x64xbf16> to vector<8x64xbf16>
    %cst_14 = arith.constant dense<0.000000e+00> : vector<8x64xf32>
    %17 = tpu.matmul %14, %16, %cst_14 {dimension_numbers = #tpu.dot_dimension_numbers<[1], [0], [0], [1], [0, 0, 1, 1], [], []>} : vector<8x8xbf16>, vector<8x64xbf16>, vector<8x64xf32> -> vector<8x64xf32>
    %c8_15 = arith.constant 8 : index
    %c0_16 = arith.constant 0 : index
    %18 = vector.load %arg7[%c8_15, %c0_16] : memref<32x1xf32, #tpu.memory_space<vmem>>, vector<8x1xf32>
    %19 = vector.broadcast %18 : vector<8x1xf32> to vector<8x64xf32>
    %20 = arith.addf %17, %19 : vector<8x64xf32>
    %21 = arith.truncf %20 : vector<8x64xf32> to vector<8x64xbf16>
    %c8_17 = arith.constant 8 : index
    %c0_18 = arith.constant 0 : index
    %22 = vector.load %arg10[%c8_17, %c0_18] : memref<32x64xbf16, #tpu.memory_space<vmem>>, vector<8x64xbf16>
    tpu.vector_store %arg10[%c8_17, %c0_18], %21 {strides = array<i32>} : memref<32x64xbf16, #tpu.memory_space<vmem>>, vector<8x64xbf16>,
    %c2 = arith.constant 2 : index
    %c0_19 = arith.constant 0 : index
    %c0_20 = arith.constant 0 : index
    %23 = vector.load %arg6[%c2, %c0_19, %c0_20] : memref<4x8x8xbf16, #tpu.memory_space<vmem>>, vector<1x8x8xbf16>
    %24 = vector.shape_cast %23 : vector<1x8x8xbf16> to vector<8x8xbf16>
    %c0_21 = arith.constant 0 : index
    %c16 = arith.constant 16 : index
    %c0_22 = arith.constant 0 : index
    %25 = vector.load %arg2[%c0_21, %c16, %c0_22] : memref<1x32x64xbf16, #tpu.memory_space<vmem>>, vector<1x8x64xbf16>
    %26 = vector.shape_cast %25 : vector<1x8x64xbf16> to vector<8x64xbf16>
    %cst_23 = arith.constant dense<0.000000e+00> : vector<8x64xf32>
    %27 = tpu.matmul %24, %26, %cst_23 {dimension_numbers = #tpu.dot_dimension_numbers<[1], [0], [0], [1], [0, 0, 1, 1], [], []>} : vector<8x8xbf16>, vector<8x64xbf16>, vector<8x64xf32> -> vector<8x64xf32>
    %c16_24 = arith.constant 16 : index
    %c0_25 = arith.constant 0 : index
    %28 = vector.load %arg7[%c16_24, %c0_25] : memref<32x1xf32, #tpu.memory_space<vmem>>, vector<8x1xf32>
    %29 = vector.broadcast %28 : vector<8x1xf32> to vector<8x64xf32>
    %30 = arith.addf %27, %29 : vector<8x64xf32>
    %31 = arith.truncf %30 : vector<8x64xf32> to vector<8x64xbf16>
    %c16_26 = arith.constant 16 : index
    %c0_27 = arith.constant 0 : index
    %32 = vector.load %arg10[%c16_26, %c0_27] : memref<32x64xbf16, #tpu.memory_space<vmem>>, vector<8x64xbf16>
    tpu.vector_store %arg10[%c16_26, %c0_27], %31 {strides = array<i32>} : memref<32x64xbf16, #tpu.memory_space<vmem>>, vector<8x64xbf16>,
    %c3 = arith.constant 3 : index
    %c0_28 = arith.constant 0 : index
    %c0_29 = arith.constant 0 : index
    %33 = vector.load %arg6[%c3, %c0_28, %c0_29] : memref<4x8x8xbf16, #tpu.memory_space<vmem>>, vector<1x8x8xbf16>
    %34 = vector.shape_cast %33 : vector<1x8x8xbf16> to vector<8x8xbf16>
    %c0_30 = arith.constant 0 : index
    %c24 = arith.constant 24 : index
    %c0_31 = arith.constant 0 : index
    %35 = vector.load %arg2[%c0_30, %c24, %c0_31] : memref<1x32x64xbf16, #tpu.memory_space<vmem>>, vector<1x8x64xbf16>
    %36 = vector.shape_cast %35 : vector<1x8x64xbf16> to vector<8x64xbf16>
    %cst_32 = arith.constant dense<0.000000e+00> : vector<8x64xf32>
    %37 = tpu.matmul %34, %36, %cst_32 {dimension_numbers = #tpu.dot_dimension_numbers<[1], [0], [0], [1], [0, 0, 1, 1], [], []>} : vector<8x8xbf16>, vector<8x64xbf16>, vector<8x64xf32> -> vector<8x64xf32>
    %c24_33 = arith.constant 24 : index
    %c0_34 = arith.constant 0 : index
    %38 = vector.load %arg7[%c24_33, %c0_34] : memref<32x1xf32, #tpu.memory_space<vmem>>, vector<8x1xf32>
    %39 = vector.broadcast %38 : vector<8x1xf32> to vector<8x64xf32>
    %40 = arith.addf %37, %39 : vector<8x64xf32>
    %41 = arith.truncf %40 : vector<8x64xf32> to vector<8x64xbf16>
    %c24_35 = arith.constant 24 : index
    %c0_36 = arith.constant 0 : index
    %42 = vector.load %arg10[%c24_35, %c0_36] : memref<32x64xbf16, #tpu.memory_space<vmem>>, vector<8x64xbf16>
    tpu.vector_store %arg10[%c24_35, %c0_36], %41 {strides = array<i32>} : memref<32x64xbf16, #tpu.memory_space<vmem>>, vector<8x64xbf16>,
    %c0_37 = arith.constant 0 : index
    %c0_38 = arith.constant 0 : index
    %43 = vector.load %arg10[%c0_37, %c0_38] : memref<32x64xbf16, #tpu.memory_space<vmem>>, vector<8x64xbf16>
    %c32 = arith.constant 32 : index
    %c0_39 = arith.constant 0 : index
    %44 = vector.load %arg9[%c32, %c0_39] : memref<64x8xbf16, #tpu.memory_space<vmem>>, vector<8x8xbf16>
    %c0_40 = arith.constant 0 : index
    %c0_41 = arith.constant 0 : index
    %45 = vector.load %arg9[%c0_40, %c0_41] : memref<64x8xbf16, #tpu.memory_space<vmem>>, vector<8x8xbf16>
    %cst_42 = arith.constant dense<0.000000e+00> : vector<8x64xf32>
    %46 = tpu.matmul %44, %43, %cst_42 {dimension_numbers = #tpu.dot_dimension_numbers<[0], [0], [1], [1], [0, 1, 1, 1], [], []>} : vector<8x8xbf16>, vector<8x64xbf16>, vector<8x64xf32> -> vector<8x64xf32>
    %cst_43 = arith.constant dense<0xFF800000> : vector<64xf32>
    %47 = vector.multi_reduction <maximumf>, %46, %cst_43 [0] : vector<8x64xf32> to vector<64xf32>
    %48 = vector.shape_cast %47 : vector<64xf32> to vector<1x64xf32>
    %49 = vector.broadcast %48 : vector<1x64xf32> to vector<8x64xf32>
    %50 = arith.subf %46, %49 : vector<8x64xf32>
    %51 = math.exp %50 : vector<8x64xf32>
    %cst_44 = arith.constant dense<0.000000e+00> : vector<64xf32>
    %52 = vector.multi_reduction <add>, %51, %cst_44 [0] : vector<8x64xf32> to vector<64xf32>
    %53 = vector.shape_cast %52 : vector<64xf32> to vector<1x64xf32>
    %54 = tpu.reciprocal %53 {approx = true} : vector<1x64xf32> -> vector<1x64xf32>
    %55 = vector.broadcast %54 : vector<1x64xf32> to vector<8x64xf32>
    %56 = arith.mulf %51, %55 : vector<8x64xf32>
    %57 = arith.truncf %56 : vector<8x64xf32> to vector<8x64xbf16>
    %cst_45 = arith.constant dense<0.000000e+00> : vector<8x64xf32>
    %58 = tpu.matmul %45, %57, %cst_45 {dimension_numbers = #tpu.dot_dimension_numbers<[1], [0], [0], [1], [0, 0, 1, 1], [], []>} : vector<8x8xbf16>, vector<8x64xbf16>, vector<8x64xf32> -> vector<8x64xf32>
    %c0_46 = arith.constant 0 : index
    %c0_47 = arith.constant 0 : index
    %c0_48 = arith.constant 0 : index
    %59 = vector.load %arg2[%c0_46, %c0_47, %c0_48] : memref<1x32x64xbf16, #tpu.memory_space<vmem>>, vector<1x8x64xbf16>
    %60 = vector.shape_cast %59 : vector<1x8x64xbf16> to vector<8x64xbf16>
    %61 = arith.extf %60 : vector<8x64xbf16> to vector<8x64xf32>
    %62 = arith.addf %61, %58 : vector<8x64xf32>
    %c0_49 = arith.constant 0 : index
    %c0_50 = arith.constant 0 : index
    %c0_51 = arith.constant 0 : index
    %63 = vector.load %arg8[%c0_49, %c0_50, %c0_51] : memref<1x32x64xf32, #tpu.memory_space<vmem>>, vector<1x8x64xf32>
    %64 = vector.shape_cast %63 : vector<1x8x64xf32> to vector<8x64xf32>
    %65 = vector.shape_cast %62 : vector<8x64xf32> to vector<1x8x64xf32>
    tpu.vector_store %arg8[%c0_49, %c0_50, %c0_51], %65 {strides = array<i32>} : memref<1x32x64xf32, #tpu.memory_space<vmem>>, vector<1x8x64xf32>,
    %c8_52 = arith.constant 8 : index
    %c0_53 = arith.constant 0 : index
    %66 = vector.load %arg10[%c8_52, %c0_53] : memref<32x64xbf16, #tpu.memory_space<vmem>>, vector<8x64xbf16>
    %c40 = arith.constant 40 : index
    %c0_54 = arith.constant 0 : index
    %67 = vector.load %arg9[%c40, %c0_54] : memref<64x8xbf16, #tpu.memory_space<vmem>>, vector<8x8xbf16>
    %c8_55 = arith.constant 8 : index
    %c0_56 = arith.constant 0 : index
    %68 = vector.load %arg9[%c8_55, %c0_56] : memref<64x8xbf16, #tpu.memory_space<vmem>>, vector<8x8xbf16>
    %cst_57 = arith.constant dense<0.000000e+00> : vector<8x64xf32>
    %69 = tpu.matmul %67, %66, %cst_57 {dimension_numbers = #tpu.dot_dimension_numbers<[0], [0], [1], [1], [0, 1, 1, 1], [], []>} : vector<8x8xbf16>, vector<8x64xbf16>, vector<8x64xf32> -> vector<8x64xf32>
    %cst_58 = arith.constant dense<0xFF800000> : vector<64xf32>
    %70 = vector.multi_reduction <maximumf>, %69, %cst_58 [0] : vector<8x64xf32> to vector<64xf32>
    %71 = vector.shape_cast %70 : vector<64xf32> to vector<1x64xf32>
    %72 = vector.broadcast %71 : vector<1x64xf32> to vector<8x64xf32>
    %73 = arith.subf %69, %72 : vector<8x64xf32>
    %74 = math.exp %73 : vector<8x64xf32>
    %cst_59 = arith.constant dense<0.000000e+00> : vector<64xf32>
    %75 = vector.multi_reduction <add>, %74, %cst_59 [0] : vector<8x64xf32> to vector<64xf32>
    %76 = vector.shape_cast %75 : vector<64xf32> to vector<1x64xf32>
    %77 = tpu.reciprocal %76 {approx = true} : vector<1x64xf32> -> vector<1x64xf32>
    %78 = vector.broadcast %77 : vector<1x64xf32> to vector<8x64xf32>
    %79 = arith.mulf %74, %78 : vector<8x64xf32>
    %80 = arith.truncf %79 : vector<8x64xf32> to vector<8x64xbf16>
    %cst_60 = arith.constant dense<0.000000e+00> : vector<8x64xf32>
    %81 = tpu.matmul %68, %80, %cst_60 {dimension_numbers = #tpu.dot_dimension_numbers<[1], [0], [0], [1], [0, 0, 1, 1], [], []>} : vector<8x8xbf16>, vector<8x64xbf16>, vector<8x64xf32> -> vector<8x64xf32>
    %c0_61 = arith.constant 0 : index
    %c8_62 = arith.constant 8 : index
    %c0_63 = arith.constant 0 : index
    %82 = vector.load %arg2[%c0_61, %c8_62, %c0_63] : memref<1x32x64xbf16, #tpu.memory_space<vmem>>, vector<1x8x64xbf16>
    %83 = vector.shape_cast %82 : vector<1x8x64xbf16> to vector<8x64xbf16>
    %84 = arith.extf %83 : vector<8x64xbf16> to vector<8x64xf32>
    %85 = arith.addf %84, %81 : vector<8x64xf32>
    %c0_64 = arith.constant 0 : index
    %c8_65 = arith.constant 8 : index
    %c0_66 = arith.constant 0 : index
    %86 = vector.load %arg8[%c0_64, %c8_65, %c0_66] : memref<1x32x64xf32, #tpu.memory_space<vmem>>, vector<1x8x64xf32>
    %87 = vector.shape_cast %86 : vector<1x8x64xf32> to vector<8x64xf32>
    %88 = vector.shape_cast %85 : vector<8x64xf32> to vector<1x8x64xf32>
    tpu.vector_store %arg8[%c0_64, %c8_65, %c0_66], %88 {strides = array<i32>} : memref<1x32x64xf32, #tpu.memory_space<vmem>>, vector<1x8x64xf32>,
    %c16_67 = arith.constant 16 : index
    %c0_68 = arith.constant 0 : index
    %89 = vector.load %arg10[%c16_67, %c0_68] : memref<32x64xbf16, #tpu.memory_space<vmem>>, vector<8x64xbf16>
    %c48 = arith.constant 48 : index
    %c0_69 = arith.constant 0 : index
    %90 = vector.load %arg9[%c48, %c0_69] : memref<64x8xbf16, #tpu.memory_space<vmem>>, vector<8x8xbf16>
    %c16_70 = arith.constant 16 : index
    %c0_71 = arith.constant 0 : index
    %91 = vector.load %arg9[%c16_70, %c0_71] : memref<64x8xbf16, #tpu.memory_space<vmem>>, vector<8x8xbf16>
    %cst_72 = arith.constant dense<0.000000e+00> : vector<8x64xf32>
    %92 = tpu.matmul %90, %89, %cst_72 {dimension_numbers = #tpu.dot_dimension_numbers<[0], [0], [1], [1], [0, 1, 1, 1], [], []>} : vector<8x8xbf16>, vector<8x64xbf16>, vector<8x64xf32> -> vector<8x64xf32>
    %cst_73 = arith.constant dense<0xFF800000> : vector<64xf32>
    %93 = vector.multi_reduction <maximumf>, %92, %cst_73 [0] : vector<8x64xf32> to vector<64xf32>
    %94 = vector.shape_cast %93 : vector<64xf32> to vector<1x64xf32>
    %95 = vector.broadcast %94 : vector<1x64xf32> to vector<8x64xf32>
    %96 = arith.subf %92, %95 : vector<8x64xf32>
    %97 = math.exp %96 : vector<8x64xf32>
    %cst_74 = arith.constant dense<0.000000e+00> : vector<64xf32>
    %98 = vector.multi_reduction <add>, %97, %cst_74 [0] : vector<8x64xf32> to vector<64xf32>
    %99 = vector.shape_cast %98 : vector<64xf32> to vector<1x64xf32>
    %100 = tpu.reciprocal %99 {approx = true} : vector<1x64xf32> -> vector<1x64xf32>
    %101 = vector.broadcast %100 : vector<1x64xf32> to vector<8x64xf32>
    %102 = arith.mulf %97, %101 : vector<8x64xf32>
    %103 = arith.truncf %102 : vector<8x64xf32> to vector<8x64xbf16>
    %cst_75 = arith.constant dense<0.000000e+00> : vector<8x64xf32>
    %104 = tpu.matmul %91, %103, %cst_75 {dimension_numbers = #tpu.dot_dimension_numbers<[1], [0], [0], [1], [0, 0, 1, 1], [], []>} : vector<8x8xbf16>, vector<8x64xbf16>, vector<8x64xf32> -> vector<8x64xf32>
    %c0_76 = arith.constant 0 : index
    %c16_77 = arith.constant 16 : index
    %c0_78 = arith.constant 0 : index
    %105 = vector.load %arg2[%c0_76, %c16_77, %c0_78] : memref<1x32x64xbf16, #tpu.memory_space<vmem>>, vector<1x8x64xbf16>
    %106 = vector.shape_cast %105 : vector<1x8x64xbf16> to vector<8x64xbf16>
    %107 = arith.extf %106 : vector<8x64xbf16> to vector<8x64xf32>
    %108 = arith.addf %107, %104 : vector<8x64xf32>
    %c0_79 = arith.constant 0 : index
    %c16_80 = arith.constant 16 : index
    %c0_81 = arith.constant 0 : index
    %109 = vector.load %arg8[%c0_79, %c16_80, %c0_81] : memref<1x32x64xf32, #tpu.memory_space<vmem>>, vector<1x8x64xf32>
    %110 = vector.shape_cast %109 : vector<1x8x64xf32> to vector<8x64xf32>
    %111 = vector.shape_cast %108 : vector<8x64xf32> to vector<1x8x64xf32>
    tpu.vector_store %arg8[%c0_79, %c16_80, %c0_81], %111 {strides = array<i32>} : memref<1x32x64xf32, #tpu.memory_space<vmem>>, vector<1x8x64xf32>,
    %c24_82 = arith.constant 24 : index
    %c0_83 = arith.constant 0 : index
    %112 = vector.load %arg10[%c24_82, %c0_83] : memref<32x64xbf16, #tpu.memory_space<vmem>>, vector<8x64xbf16>
    %c56 = arith.constant 56 : index
    %c0_84 = arith.constant 0 : index
    %113 = vector.load %arg9[%c56, %c0_84] : memref<64x8xbf16, #tpu.memory_space<vmem>>, vector<8x8xbf16>
    %c24_85 = arith.constant 24 : index
    %c0_86 = arith.constant 0 : index
    %114 = vector.load %arg9[%c24_85, %c0_86] : memref<64x8xbf16, #tpu.memory_space<vmem>>, vector<8x8xbf16>
    %cst_87 = arith.constant dense<0.000000e+00> : vector<8x64xf32>
    %115 = tpu.matmul %113, %112, %cst_87 {dimension_numbers = #tpu.dot_dimension_numbers<[0], [0], [1], [1], [0, 1, 1, 1], [], []>} : vector<8x8xbf16>, vector<8x64xbf16>, vector<8x64xf32> -> vector<8x64xf32>
    %cst_88 = arith.constant dense<0xFF800000> : vector<64xf32>
    %116 = vector.multi_reduction <maximumf>, %115, %cst_88 [0] : vector<8x64xf32> to vector<64xf32>
    %117 = vector.shape_cast %116 : vector<64xf32> to vector<1x64xf32>
    %118 = vector.broadcast %117 : vector<1x64xf32> to vector<8x64xf32>
    %119 = arith.subf %115, %118 : vector<8x64xf32>
    %120 = math.exp %119 : vector<8x64xf32>
    %cst_89 = arith.constant dense<0.000000e+00> : vector<64xf32>
    %121 = vector.multi_reduction <add>, %120, %cst_89 [0] : vector<8x64xf32> to vector<64xf32>
    %122 = vector.shape_cast %121 : vector<64xf32> to vector<1x64xf32>
    %123 = tpu.reciprocal %122 {approx = true} : vector<1x64xf32> -> vector<1x64xf32>
    %124 = vector.broadcast %123 : vector<1x64xf32> to vector<8x64xf32>
    %125 = arith.mulf %120, %124 : vector<8x64xf32>
    %126 = arith.truncf %125 : vector<8x64xf32> to vector<8x64xbf16>
    %cst_90 = arith.constant dense<0.000000e+00> : vector<8x64xf32>
    %127 = tpu.matmul %114, %126, %cst_90 {dimension_numbers = #tpu.dot_dimension_numbers<[1], [0], [0], [1], [0, 0, 1, 1], [], []>} : vector<8x8xbf16>, vector<8x64xbf16>, vector<8x64xf32> -> vector<8x64xf32>
    %c0_91 = arith.constant 0 : index
    %c24_92 = arith.constant 24 : index
    %c0_93 = arith.constant 0 : index
    %128 = vector.load %arg2[%c0_91, %c24_92, %c0_93] : memref<1x32x64xbf16, #tpu.memory_space<vmem>>, vector<1x8x64xbf16>
    %129 = vector.shape_cast %128 : vector<1x8x64xbf16> to vector<8x64xbf16>
    %130 = arith.extf %129 : vector<8x64xbf16> to vector<8x64xf32>
    %131 = arith.addf %130, %127 : vector<8x64xf32>
    %c0_94 = arith.constant 0 : index
    %c24_95 = arith.constant 24 : index
    %c0_96 = arith.constant 0 : index
    %132 = vector.load %arg8[%c0_94, %c24_95, %c0_96] : memref<1x32x64xf32, #tpu.memory_space<vmem>>, vector<1x8x64xf32>
    %133 = vector.shape_cast %132 : vector<1x8x64xf32> to vector<8x64xf32>
    %134 = vector.shape_cast %131 : vector<8x64xf32> to vector<1x8x64xf32>
    tpu.vector_store %arg8[%c0_94, %c24_95, %c0_96], %134 {strides = array<i32>} : memref<1x32x64xf32, #tpu.memory_space<vmem>>, vector<1x8x64xf32>,
    return
  }
  func.func @transform_0(%arg0: i32, %arg1: i32) -> (i32, i32, i32) {
    %c0_i32 = arith.constant 0 : i32
    %c0_i32_0 = arith.constant 0 : i32
    return %arg0, %c0_i32, %arg1 : i32, i32, i32
  }
  func.func @transform_1(%arg0: i32, %arg1: i32) -> (i32, i32, i32) {
    %c0_i32 = arith.constant 0 : i32
    %c0_i32_0 = arith.constant 0 : i32
    %c0_i32_1 = arith.constant 0 : i32
    return %arg0, %c0_i32, %c0_i32_0 : i32, i32, i32
  }
  func.func @transform_2(%arg0: i32, %arg1: i32) -> (i32, i32) {
    %c0_i32 = arith.constant 0 : i32
    %c0_i32_0 = arith.constant 0 : i32
    %c0_i32_1 = arith.constant 0 : i32
    return %c0_i32, %c0_i32_0 : i32, i32
  }
  func.func @transform_3(%arg0: i32, %arg1: i32) -> (i32, i32) {
    %c0_i32 = arith.constant 0 : i32
    %c0_i32_0 = arith.constant 0 : i32
    %c0_i32_1 = arith.constant 0 : i32
    return %c0_i32, %c0_i32_0 : i32, i32
  }
  func.func @transform_4(%arg0: i32, %arg1: i32) -> (i32, i32, i32) {
    %c0_i32 = arith.constant 0 : i32
    %c0_i32_0 = arith.constant 0 : i32
    %c0_i32_1 = arith.constant 0 : i32
    %c0_i32_2 = arith.constant 0 : i32
    return %c0_i32, %c0_i32_0, %c0_i32_1 : i32, i32, i32
  }
  func.func @transform_5(%arg0: i32, %arg1: i32) -> (i32, i32) {
    %c0_i32 = arith.constant 0 : i32
    %c0_i32_0 = arith.constant 0 : i32
    %c0_i32_1 = arith.constant 0 : i32
    return %c0_i32, %c0_i32_0 : i32, i32
  }
  func.func @transform_6(%arg0: i32, %arg1: i32) -> (i32, i32, i32) {
    %c0_i32 = arith.constant 0 : i32
    %c0_i32_0 = arith.constant 0 : i32
    return %arg0, %c0_i32, %arg1 : i32, i32, i32
  }
}

</mosaic_0001>

<llo_original>
// kernel: tpu_custom_call.1
$region0: #{tpu_custom_call.1}
  #allocation0 [shape = 'u32[]', space=smem, size = 0x4, offset = 0x4, fixed_abs, tag = 'smem constant byte address 0x4 - core index']
  #allocation1 [shape = 'u32[144,128]{1,0:T(1,128)}', space=vmem, size = 0x12000, scoped, tag = 'internal scratch']
  #allocation2 [shape = 'bf16[64,8]{1,0:T(16,128)(2,1)}', space=vmem, size = 0x4000, scoped, tag = 'scratch operand']
  #allocation3 [shape = 'bf16[32,64]{1,0:T(16,128)(2,1)}', space=vmem, size = 0x2000, scoped, tag = 'scratch operand']
  %s0 = inlined_call_operand.vmem [shape: bf16[2,32,64], index: 0, kind: input, shape index: {}]
  %s1 = inlined_call_operand.vmem [shape: bf16[2,32,8], index: 1, kind: input, shape index: {}]
  %s2 = inlined_call_operand.vmem [shape: bf16[64,32], index: 2, kind: input, shape index: {}]
  %s3 = inlined_call_operand.vmem [shape: f32[64,1], index: 3, kind: input, shape index: {}]
  %s4 = inlined_call_operand.vmem [shape: bf16[4,8,8], index: 4, kind: input, shape index: {}]
  %s5 = inlined_call_operand.vmem [shape: f32[32,1], index: 5, kind: input, shape index: {}]
  %s6 = inlined_call_operand.hbm [shape: f32[2,32,64], index: 6, kind: output, shape index: {}]
  %s7 = sld [smem:[#allocation0]]
  $region61: #{tpu_custom_call.1} parent=0
    _
  %s9 = ssub.s32 1, %s7
  %s10 = scalar_select 0, %s9, %s7
  $region1: #{tpu_custom_call.1} parent=0
    #allocation4 [shape = 'u8[32768]{0}', space=vmem, size = 0x8000, scoped, tag = 'output window, operand 0']
    #allocation5 [shape = 's32[2]{0}', space=sflag, size = 0x8, scoped, tag = 'scoped memory for tpu_custom_call.1']
    %11 = vsyncpa [#allocation5], 0
    %s12 = scalar_lea.sflag [#allocation5], 1
    %13 = vsyncpa %s12, 0
    loop: start=0, step=1, limit=4
    $region2: #{tpu_custom_call.1} parent=1 // loop_pre_header
      _
    $region3: #{tpu_custom_call.1} parent=1 // loop_header
      %s15 = sphi 0, %s19
      %p16 = scmp.ge.s32.totalorder %s15, 4
      %s22 = sphi 0, %s34
      %s23 = sphi 0, %s30
      %s24 = sphi 0, %s22
      %s25 = sphi 0, %s23
      %s26 = sphi 0, %s24
      %s27 = sphi 0, %s25
      %s39 = sphi 0, %s41
      %s42 = sphi 0, %s39
      %s43 = sphi 0, %s42
      %s59 = sphi 0, %s43
      %s65 = sphi 0, %s67
      %s68 = sphi 0, %s65
      %s69 = sphi 0, %s68
      %s85 = sphi 0, %s69
      %s89 = sphi 0, %s89
      %s91 = sphi 0, %s89
      %s92 = sphi 0, %s91
      %s106 = sphi 0, %s92
      %s110 = sphi 0, %s110
      %s112 = sphi 0, %s110
      %s113 = sphi 0, %s112
      %s127 = sphi 0, %s113
      %s131 = sphi 0, %s131
      %s133 = sphi 0, %s131
      %s134 = sphi 0, %s133
      %s148 = sphi 0, %s134
      %s152 = sphi 0, %s152
      %s154 = sphi 0, %s152
      %s155 = sphi 0, %s154
      %s169 = sphi 0, %s155
      %s177 = sphi 0, %s179
      %s180 = sphi 0, %s177
      %s181 = sphi 0, %s180
      %s197 = sphi 0, %s181
    $region4: #{tpu_custom_call.1} parent=1 // loop_header_branch
      %18 = sbr.rel (%p16) target = $region8
    $region5: #{tpu_custom_call.1} parent=1 // loop_body
      %s20 = ssub.s32 %s15, 1
      %s21 = ssub.s32 %s15, 2
      %s28 = sadd.s32 1, %s23
      %p29 = scmp.ge.s32.totalorder %s28, 1
      %s30 = scalar_select %p29, 0, %s28
      %s31 = sadd.s32 1, %s22
      %s32 = scalar_select %p29, %s31, %s22
      %p33 = scmp.ge.s32.totalorder %s32, 2
      %s34 = scalar_select %p33, 0, %s32
      %s35 = ssub.s32 %s22, %s34
      %s36 = ssub.s32 %s23, %s30
      %s37 = sor.u32 %s35, %s36
      %p38 = scmp.eq.s32.totalorder %s37, 0
      %s40 = sadd.s32 %s39, 1
      %s41 = scalar_select %p38, %s39, %s40
      %p44 = pneg %p38
      %p45 = scmp.eq.s32.totalorder %s15, 1
      %p46 = por %p44, %p45
      %p47 = scmp.ne.s32.totalorder %s39, %s42
      %p48 = scmp.eq.s32.totalorder %s15, 0
      %p49 = por %p47, %p48
      %p50 = scmp.ne.s32.totalorder %s39, %s42
      %p51 = scmp.eq.s32.totalorder %s20, 1
      %p52 = por %p50, %p51
      %p53 = scmp.ne.s32.totalorder %s42, %s43
      %p54 = scmp.eq.s32.totalorder %s20, 0
      %p55 = por %p53, %p54
      %p56 = scmp.ne.s32.totalorder %s42, %s43
      %p57 = scmp.eq.s32.totalorder %s21, 1
      %p58 = por %p56, %p57
      %p60 = scmp.ne.s32.totalorder %s43, %s59
      %p61 = scmp.eq.s32.totalorder %s21, 0
      %p62 = por %p60, %p61
      %s63 = ssub.s32 %s22, %s34
      %p64 = scmp.eq.s32.totalorder %s63, 0
      %s66 = sadd.s32 %s65, 1
      %s67 = scalar_select %p64, %s65, %s66
      %p70 = pneg %p64
      %p71 = scmp.eq.s32.totalorder %s15, 1
      %p72 = por %p70, %p71
      %p73 = scmp.ne.s32.totalorder %s65, %s68
      %p74 = scmp.eq.s32.totalorder %s15, 0
      %p75 = por %p73, %p74
      %p76 = scmp.ne.s32.totalorder %s65, %s68
      %p77 = scmp.eq.s32.totalorder %s20, 1
      %p78 = por %p76, %p77
      %p79 = scmp.ne.s32.totalorder %s68, %s69
      %p80 = scmp.eq.s32.totalorder %s20, 0
      %p81 = por %p79, %p80
      %p82 = scmp.ne.s32.totalorder %s68, %s69
      %p83 = scmp.eq.s32.totalorder %s21, 1
      %p84 = por %p82, %p83
      %p86 = scmp.ne.s32.totalorder %s69, %s85
      %p87 = scmp.eq.s32.totalorder %s21, 0
      %p88 = por %p86, %p87
      %s90 = sadd.s32 %s89, 1
      %p93 = scmp.eq.s32.totalorder %s15, 1
      %p94 = scmp.ne.s32.totalorder %s89, %s91
      %p95 = scmp.eq.s32.totalorder %s15, 0
      %p96 = por %p94, %p95
      %p97 = scmp.ne.s32.totalorder %s89, %s91
      %p98 = scmp.eq.s32.totalorder %s20, 1
      %p99 = por %p97, %p98
      %p100 = scmp.ne.s32.totalorder %s91, %s92
      %p101 = scmp.eq.s32.totalorder %s20, 0
      %p102 = por %p100, %p101
      %p103 = scmp.ne.s32.totalorder %s91, %s92
      %p104 = scmp.eq.s32.totalorder %s21, 1
      %p105 = por %p103, %p104
      %p107 = scmp.ne.s32.totalorder %s92, %s106
      %p108 = scmp.eq.s32.totalorder %s21, 0
      %p109 = por %p107, %p108
      %s111 = sadd.s32 %s110, 1
      %p114 = scmp.eq.s32.totalorder %s15, 1
      %p115 = scmp.ne.s32.totalorder %s110, %s112
      %p116 = scmp.eq.s32.totalorder %s15, 0
      %p117 = por %p115, %p116
      %p118 = scmp.ne.s32.totalorder %s110, %s112
      %p119 = scmp.eq.s32.totalorder %s20, 1
      %p120 = por %p118, %p119
      %p121 = scmp.ne.s32.totalorder %s112, %s113
      %p122 = scmp.eq.s32.totalorder %s20, 0
      %p123 = por %p121, %p122
      %p124 = scmp.ne.s32.totalorder %s112, %s113
      %p125 = scmp.eq.s32.totalorder %s21, 1
      %p126 = por %p124, %p125
      %p128 = scmp.ne.s32.totalorder %s113, %s127
      %p129 = scmp.eq.s32.totalorder %s21, 0
      %p130 = por %p128, %p129
      %s132 = sadd.s32 %s131, 1
      %p135 = scmp.eq.s32.totalorder %s15, 1
      %p136 = scmp.ne.s32.totalorder %s131, %s133
      %p137 = scmp.eq.s32.totalorder %s15, 0
      %p138 = por %p136, %p137
      %p139 = scmp.ne.s32.totalorder %s131, %s133
      %p140 = scmp.eq.s32.totalorder %s20, 1
      %p141 = por %p139, %p140
      %p142 = scmp.ne.s32.totalorder %s133, %s134
      %p143 = scmp.eq.s32.totalorder %s20, 0
      %p144 = por %p142, %p143
      %p145 = scmp.ne.s32.totalorder %s133, %s134
      %p146 = scmp.eq.s32.totalorder %s21, 1
      %p147 = por %p145, %p146
      %p149 = scmp.ne.s32.totalorder %s134, %s148
      %p150 = scmp.eq.s32.totalorder %s21, 0
      %p151 = por %p149, %p150
      %s153 = sadd.s32 %s152, 1
      %p156 = scmp.eq.s32.totalorder %s15, 1
      %p157 = scmp.ne.s32.totalorder %s152, %s154
      %p158 = scmp.eq.s32.totalorder %s15, 0
      %p159 = por %p157, %p158
      %p160 = scmp.ne.s32.totalorder %s152, %s154
      %p161 = scmp.eq.s32.totalorder %s20, 1
      %p162 = por %p160, %p161
      %p163 = scmp.ne.s32.totalorder %s154, %s155
      %p164 = scmp.eq.s32.totalorder %s20, 0
      %p165 = por %p163, %p164
      %p166 = scmp.ne.s32.totalorder %s154, %s155
      %p167 = scmp.eq.s32.totalorder %s21, 1
      %p168 = por %p166, %p167
      %p170 = scmp.ne.s32.totalorder %s155, %s169
      %p171 = scmp.eq.s32.totalorder %s21, 0
      %p172 = por %p170, %p171
      %s173 = ssub.s32 %s22, %s34
      %s174 = ssub.s32 %s23, %s30
      %s175 = sor.u32 %s173, %s174
      %p176 = scmp.eq.s32.totalorder %s175, 0
      %s178 = sadd.s32 %s177, 1
      %s179 = scalar_select %p176, %s177, %s178
      %p182 = pneg %p176
      %p183 = scmp.eq.s32.totalorder %s15, 1
      %p184 = por %p182, %p183
      %p185 = scmp.ne.s32.totalorder %s177, %s180
      %p186 = scmp.eq.s32.totalorder %s15, 0
      %p187 = por %p185, %p186
      %p188 = scmp.ne.s32.totalorder %s177, %s180
      %p189 = scmp.eq.s32.totalorder %s20, 1
      %p190 = por %p188, %p189
      %p191 = scmp.ne.s32.totalorder %s180, %s181
      %p192 = scmp.eq.s32.totalorder %s20, 0
      %p193 = por %p191, %p192
      %p194 = scmp.ne.s32.totalorder %s180, %s181
      %p195 = scmp.eq.s32.totalorder %s21, 1
      %p196 = por %p194, %p195
      %p198 = scmp.ne.s32.totalorder %s181, %s197
      %p199 = scmp.eq.s32.totalorder %s21, 0
      %p200 = por %p198, %p199
      %p201 = scmp.le.s32.totalorder 1, %s15
      %p202 = scmp.lt.s32.totalorder %s15, 3
      %p203 = pnand %p201, %p202
      %p204 = pneg %p203
      // Predicated region
      $region9: #{tpu_custom_call.1} parent=5 // pred_check
        _
      $region10: #{tpu_custom_call.1} parent=5 // pred_check_branch
        %206 = sbr.rel (%p203) target = $region12
      $region11: #{tpu_custom_call.1} parent=5 // pred_region
        %s207 = ssub.s32 %s15, 1
        // Predicated region
        $region13: #{tpu_custom_call.1} parent=11 // pred_check
          %p208 = pneg %p102
        $region14: #{tpu_custom_call.1} parent=11 // pred_check_branch
          %210 = sbr.rel (%p208) target = $region16
        $region15: #{tpu_custom_call.1} parent=11 // pred_region
          _
        $region16: #{tpu_custom_call.1} parent=11 // pred_fallthru
          _
        // Predicated region
        $region17: #{tpu_custom_call.1} parent=11 // pred_check
          %p211 = pneg %p123
        $region18: #{tpu_custom_call.1} parent=11 // pred_check_branch
          %213 = sbr.rel (%p211) target = $region20
        $region19: #{tpu_custom_call.1} parent=11 // pred_region
          _
        $region20: #{tpu_custom_call.1} parent=11 // pred_fallthru
          _
        // Predicated region
        $region21: #{tpu_custom_call.1} parent=11 // pred_check
          %p214 = pneg %p144
        $region22: #{tpu_custom_call.1} parent=11 // pred_check_branch
          %216 = sbr.rel (%p214) target = $region24
        $region23: #{tpu_custom_call.1} parent=11 // pred_region
          _
        $region24: #{tpu_custom_call.1} parent=11 // pred_fallthru
          _
        // Predicated region
        $region25: #{tpu_custom_call.1} parent=11 // pred_check
          %p217 = pneg %p165
        $region26: #{tpu_custom_call.1} parent=11 // pred_check_branch
          %219 = sbr.rel (%p217) target = $region28
        $region27: #{tpu_custom_call.1} parent=11 // pred_region
          _
        $region28: #{tpu_custom_call.1} parent=11 // pred_fallthru
          _
      $region12: #{tpu_custom_call.1} parent=5 // pred_fallthru
        _
      %p220 = scmp.lt.s32.totalorder %s15, 2
      // Predicated region
      $region29: #{tpu_custom_call.1} parent=5 // pred_check
        %p221 = pneg %p220
      $region30: #{tpu_custom_call.1} parent=5 // pred_check_branch
        %223 = sbr.rel (%p221) target = $region32
      $region31: #{tpu_custom_call.1} parent=5 // pred_region
        // Predicated region
        $region33: #{tpu_custom_call.1} parent=31 // pred_check
          %p224 = pneg %p49
        $region34: #{tpu_custom_call.1} parent=31 // pred_check_branch
          %226 = sbr.rel (%p224) target = $region36
        $region35: #{tpu_custom_call.1} parent=31 // pred_region
          %p227 = scmp.lt.s32.totalorder %s22, 1
          %s228 = scalar_select %p227, %s22, 1
          %p229 = scmp.lt.s32.totalorder %s23, 0
          %s230 = scalar_select %p229, %s23, 0
          %s231 = smul.addr %s228, 4
          %s232 = sadd.s32 %s230, %s231
          %s233 = smul.addr %s232, 4
          %s234 = scalar_lea.vmem %s0, %s233
        $region36: #{tpu_custom_call.1} parent=31 // pred_fallthru
          _
        // Predicated region
        $region37: #{tpu_custom_call.1} parent=31 // pred_check
          %p235 = pneg %p75
        $region38: #{tpu_custom_call.1} parent=31 // pred_check_branch
          %237 = sbr.rel (%p235) target = $region40
        $region39: #{tpu_custom_call.1} parent=31 // pred_region
          %p238 = scmp.lt.s32.totalorder %s22, 1
          %s239 = scalar_select %p238, %s22, 1
          %s240 = smul.addr %s239, 4
          %s241 = smul.addr %s240, 4
          %s242 = scalar_lea.vmem %s1, %s241
        $region40: #{tpu_custom_call.1} parent=31 // pred_fallthru
          _
      $region32: #{tpu_custom_call.1} parent=5 // pred_fallthru
        _
      %p243 = scmp.le.s32.totalorder 1, %s15
      %p244 = scmp.lt.s32.totalorder %s15, 3
      %p245 = pnand %p243, %p244
      %p246 = pneg %p245
      // Predicated region
      $region41: #{tpu_custom_call.1} parent=5 // pred_check
        _
      $region42: #{tpu_custom_call.1} parent=5 // pred_check_branch
        %248 = sbr.rel (%p245) target = $region44
      $region43: #{tpu_custom_call.1} parent=5 // pred_region
        %s249 = ssub.s32 %s15, 1
        %p250 = scmp.lt.s32.totalorder %s24, 1
        %s251 = scalar_select %p250, %s24, 1
        %p252 = scmp.lt.s32.totalorder %s25, 0
        %s253 = scalar_select %p252, %s25, 0
        %s254 = smul.addr %s251, 4
        %s255 = sadd.s32 %s253, %s254
        %s256 = smul.addr %s255, 4
        %s257 = scalar_lea.vmem %s0, %s256
        %p258 = pneg %p55
        %p259 = pneg %p52
        %p260 = scmp.lt.s32.totalorder %s24, 1
        %s261 = scalar_select %p260, %s24, 1
        %s262 = smul.addr %s261, 4
        %s263 = smul.addr %s262, 4
        %s264 = scalar_lea.vmem %s1, %s263
        %p265 = pneg %p81
        %p266 = pneg %p78
        %p267 = pneg %p102
        %p268 = pneg %p99
        %p269 = pneg %p123
        %p270 = pneg %p120
        %p271 = pneg %p144
        %p272 = pneg %p141
        %p273 = pneg %p165
        %p274 = pneg %p162
        %p275 = pneg %p193
        %p276 = pneg %p190
        %s277 = sand.u32 %s180, 1
        %s278 = scalar_lea.sflag [#allocation5], %s277
        %s279 = sand.u32 %s180, 1
        %s280 = smul.addr %s279, 32
        %s281 = scalar_lea.vmem [#allocation4], %s280
        %p282 = scmp.lt.s32.totalorder %s24, 1
        %s283 = scalar_select %p282, %s24, 1
        %p284 = scmp.lt.s32.totalorder %s25, 0
        %s285 = scalar_select %p284, %s25, 0
        %s286 = smul.addr %s283, 4
        %s287 = sadd.s32 %s285, %s286
        %s288 = smul.addr %s287, 4
        %s289 = scalar_lea.vmem %s0, %s288
        %p290 = scmp.lt.s32.totalorder %s24, 1
        %s291 = scalar_select %p290, %s24, 1
        %s292 = smul.addr %s291, 4
        %s293 = smul.addr %s292, 4
        %s294 = scalar_lea.vmem %s1, %s293
        %p296 = scmp.eq.s32.totalorder %s25, 0
        // Predicated region
        $region45: #{tpu_custom_call.1} parent=43 // pred_check
          %p297 = pneg %p296
        $region46: #{tpu_custom_call.1} parent=43 // pred_check_branch
          %299 = sbr.rel (%p297) target = $region48
        $region47: #{tpu_custom_call.1} parent=43 // pred_region
          %v300 = vld [vmem:[%s2] sm:$0xf]
          %v301 = vld [vmem:[%s2 + $0x4] sm:$0xf]
          %v302 = vld [vmem:[%s2 + $0x8] sm:$0xf]
          %v303 = vld [vmem:[%s2 + $0xc] sm:$0xf]
          %v304 = vld [vmem:[%s2 + $0x10] sm:$0xf]
          %v305 = vld [vmem:[%s2 + $0x14] sm:$0xf]
          %v306 = vld [vmem:[%s2 + $0x18] sm:$0xf]
          %v307 = vld [vmem:[%s2 + $0x1c] sm:$0xf]
          %v308 = vld [vmem:[%s294] sm:$0xf]
          %v309 = vld [vmem:[%s294 + $0x4] sm:$0xf]
          %v310 = vld [vmem:[%s294 + $0x8] sm:$0xf]
          %v311 = vld [vmem:[%s294 + $0xc] sm:$0xf]
          %v312 = vld [vmem:[%s3] sm:$0xff]
          %v313 = vld [vmem:[%s3 + $0x8] sm:$0xff]
          %v314 = vld [vmem:[%s3 + $0x10] sm:$0xff]
          %v315 = vld [vmem:[%s3 + $0x18] sm:$0xff]
          %v316 = vld [vmem:[%s3 + $0x20] sm:$0xff]
          %v317 = vld [vmem:[%s3 + $0x28] sm:$0xff]
          %v318 = vld [vmem:[%s3 + $0x30] sm:$0xff]
          %v319 = vld [vmem:[%s3 + $0x38] sm:$0xff]
          %321 = vset.pattern.permute.xlu0 0
          %322 = vperm.xlu0 %321, %v312
          %v323 = vpop.permute.xlu0 %322
          %326 = vset.pattern.permute.xlu0 0
          %327 = vperm.xlu0 %326, %v313
          %v328 = vpop.permute.xlu0 %327
          %331 = vset.pattern.permute.xlu0 0
          %332 = vperm.xlu0 %331, %v314
          %v333 = vpop.permute.xlu0 %332
          %336 = vset.pattern.permute.xlu0 0
          %337 = vperm.xlu0 %336, %v315
          %v338 = vpop.permute.xlu0 %337
          %341 = vset.pattern.permute.xlu0 0
          %342 = vperm.xlu0 %341, %v316
          %v343 = vpop.permute.xlu0 %342
          %346 = vset.pattern.permute.xlu0 0
          %347 = vperm.xlu0 %346, %v317
          %v348 = vpop.permute.xlu0 %347
          %351 = vset.pattern.permute.xlu0 0
          %352 = vperm.xlu0 %351, %v318
          %v353 = vpop.permute.xlu0 %352
          %356 = vset.pattern.permute.xlu0 0
          %357 = vperm.xlu0 %356, %v319
          %v358 = vpop.permute.xlu0 %357
          %v368 = vunpack.c.l.b16 %v300
          %v369 = vunpack.c.l.b16 %v301
          %v370 = vunpack.c.l.b16 %v302
          %v371 = vunpack.c.l.b16 %v303
          %v372 = vunpack.c.l.b16 %v304
          %v373 = vunpack.c.l.b16 %v305
          %v374 = vunpack.c.l.b16 %v306
          %v375 = vunpack.c.l.b16 %v307
          %v376 = vpack.c.b16 %v369, %v368
          %v377 = vpack.c.b16 %v371, %v370
          %v378 = vpack.c.b16 %v373, %v372
          %v379 = vpack.c.b16 %v375, %v374
          %v384 = vunpack.c.l.b16 %v308
          %v385 = vunpack.c.l.b16 %v309
          %v386 = vunpack.c.l.b16 %v310
          %v387 = vunpack.c.l.b16 %v311
          %v388 = vpack.c.b16 %v385, %v384
          %v389 = vpack.c.b16 %v387, %v386
          %vm392 = vcmask 261120
          %v394 = vsel %vm392, %v376, 0
          %v397 = vsel %vm392, %v377, 0
          %v400 = vsel %vm392, %v378, 0
          %v403 = vsel %vm392, %v379, 0
          %405 = vmatprep.subr.bf16.mxu0 0
          %406 = vmatpush1.bf16.msra.mxu0 %v388
          %407 = vmatprep.subr.bf16.mxu0 0
          %408 = vmatpush1.bf16.msra.mxu0 %v389
          %409 = vmatprep.subr.bf16.mxu0 0
          %410 = vmatpush1.bf16.msra.mxu0 0
          %411 = vmatprep.subr.bf16.mxu0 0
          %412 = vmatpush1.bf16.msra.mxu0 0
          %413 = vmatprep.subr.bf16.mxu0 0
          %414 = vmatpush1.bf16.msra.mxu0 0
          %415 = vmatprep.subr.bf16.mxu0 0
          %416 = vmatpush1.bf16.msra.mxu0 0
          %417 = vmatprep.subr.bf16.mxu0 0
          %418 = vmatpush1.bf16.msra.mxu0 0
          %419 = vmatprep.subr.bf16.mxu0 0
          %420 = vmatpush1.bf16.msra.mxu0 0
          %421 = vmatprep.subr.bf16.mxu0 0
          %422 = vmatpush1.bf16.msra.mxu0 0
          %423 = vmatprep.subr.bf16.mxu0 0
          %424 = vmatpush1.bf16.msra.mxu0 0
          %425 = vmatprep.subr.bf16.mxu0 0
          %426 = vmatpush1.bf16.msra.mxu0 0
          %427 = vmatprep.subr.bf16.mxu0 0
          %428 = vmatpush1.bf16.msra.mxu0 0
          %429 = vmatprep.subr.bf16.mxu0 0
          %430 = vmatpush1.bf16.msra.mxu0 0
          %431 = vmatprep.subr.bf16.mxu0 0
          %432 = vmatpush1.bf16.msra.mxu0 0
          %433 = vmatprep.subr.bf16.mxu0 0
          %434 = vmatpush1.bf16.msra.mxu0 0
          %435 = vmatprep.subr.bf16.mxu0 0
          %436 = vmatpush1.bf16.msra.mxu0 0
          %437 = vmatprep.mubr.bf16.mxu0 0
          %438 = vmatmul.mubr.bf16.gmra.mrb[0].mxu0 %v394
          %v439 = vpop.f32.mrb[0].mxu0
          %v440 = vadd.f32 %v323, %v439
          %v441 = vpop.f32.mrb[0].mxu0
          %v442 = vpop.f32.mrb[0].mxu0
          %v443 = vadd.f32 %v328, %v442
          %v444 = vpop.f32.mrb[0].mxu0
          %445 = vmatprep.mubr.bf16.mxu0 0
          %446 = vmatmul.mubr.bf16.gmra.mrb[0].mxu0 %v397
          %v447 = vpop.f32.mrb[0].mxu0
          %v448 = vadd.f32 %v333, %v447
          %v449 = vpop.f32.mrb[0].mxu0
          %v450 = vpop.f32.mrb[0].mxu0
          %v451 = vadd.f32 %v338, %v450
          %v452 = vpop.f32.mrb[0].mxu0
          %453 = vmatprep.mubr.bf16.mxu0 0
          %454 = vmatmul.mubr.bf16.gmra.mrb[0].mxu0 %v400
          %v455 = vpop.f32.mrb[0].mxu0
          %v456 = vadd.f32 %v343, %v455
          %v457 = vpop.f32.mrb[0].mxu0
          %v458 = vpop.f32.mrb[0].mxu0
          %v459 = vadd.f32 %v348, %v458
          %v460 = vpop.f32.mrb[0].mxu0
          %461 = vmatprep.mubr.bf16.mxu0 0
          %462 = vmatmul.mubr.bf16.gmra.mrb[0].mxu0 %v403
          %v463 = vpop.f32.mrb[0].mxu0
          %v464 = vadd.f32 %v353, %v463
          %v465 = vpop.f32.mrb[0].mxu0
          %v466 = vpop.f32.mrb[0].mxu0
          %v467 = vadd.f32 %v358, %v466
          %v468 = vpop.f32.mrb[0].mxu0
          %469 = vdwg.mxu0
          %v470 = vpack.c.bf16 %v443, %v440
          %v471 = vpack.c.bf16 %v451, %v448
          %v472 = vpack.c.bf16 %v459, %v456
          %v473 = vpack.c.bf16 %v467, %v464
          %vm474 = vcmask 64512
          %475 = vst.msk [vmem:[#allocation2] sm:$0xff] %vm474, %v470
          %476 = vst.msk [vmem:[#allocation2 + $0x8] sm:$0xff] %vm474, %v471
          %477 = vst.msk [vmem:[#allocation2 + $0x10] sm:$0xff] %vm474, %v472
          %478 = vst.msk [vmem:[#allocation2 + $0x18] sm:$0xff] %vm474, %v473
        $region48: #{tpu_custom_call.1} parent=43 // pred_fallthru
          _
        %v479 = vld [vmem:[%s4] sm:$0xf]
        %v480 = vld [vmem:[%s289] sm:$0xf]
        %v481 = vld [vmem:[%s5] sm:$0xff]
        %483 = vset.pattern.permute.xlu0 0
        %484 = vperm.xlu0 %483, %v481
        %v485 = vpop.permute.xlu0 %484
        %vm487 = vcmask 64512
        %v489 = vsel %vm487, %v479, 0
        %vm491 = vcmask 1043456
        %v493 = vsel %vm491, %v480, 0
        %495 = vmatprep.subr.bf16.mxu0 0
        %496 = vmatpush1.bf16.msra.mxu0 %v493
        %497 = vmatprep.subr.bf16.mxu0 0
        %498 = vmatpush1.bf16.msra.mxu0 0
        %499 = vmatprep.subr.bf16.mxu0 0
        %500 = vmatpush1.bf16.msra.mxu0 0
        %501 = vmatprep.subr.bf16.mxu0 0
        %502 = vmatpush1.bf16.msra.mxu0 0
        %503 = vmatprep.subr.bf16.mxu0 0
        %504 = vmatpush1.bf16.msra.mxu0 0
        %505 = vmatprep.subr.bf16.mxu0 0
        %506 = vmatpush1.bf16.msra.mxu0 0
        %507 = vmatprep.subr.bf16.mxu0 0
        %508 = vmatpush1.bf16.msra.mxu0 0
        %509 = vmatprep.subr.bf16.mxu0 0
        %510 = vmatpush1.bf16.msra.mxu0 0
        %511 = vmatprep.subr.bf16.mxu0 0
        %512 = vmatpush1.bf16.msra.mxu0 0
        %513 = vmatprep.subr.bf16.mxu0 0
        %514 = vmatpush1.bf16.msra.mxu0 0
        %515 = vmatprep.subr.bf16.mxu0 0
        %516 = vmatpush1.bf16.msra.mxu0 0
        %517 = vmatprep.subr.bf16.mxu0 0
        %518 = vmatpush1.bf16.msra.mxu0 0
        %519 = vmatprep.subr.bf16.mxu0 0
        %520 = vmatpush1.bf16.msra.mxu0 0
        %521 = vmatprep.subr.bf16.mxu0 0
        %522 = vmatpush1.bf16.msra.mxu0 0
        %523 = vmatprep.subr.bf16.mxu0 0
        %524 = vmatpush1.bf16.msra.mxu0 0
        %525 = vmatprep.subr.bf16.mxu0 0
        %526 = vmatpush1.bf16.msra.mxu0 0
        %527 = vmatprep.mubr.bf16.mxu0 0
        %528 = vmatmul.mubr.bf16.gmra.mrb[0].mxu0 %v489
        %v529 = vpop.f32.mrb[0].mxu0
        %v530 = vadd.f32 %v485, %v529
        %v531 = vpop.f32.mrb[0].mxu0
        %v532 = vpop.f32.mrb[0].mxu0
        %v533 = vpop.f32.mrb[0].mxu0
        %534 = vdwg.mxu0
        %v535 = vpack.c.bf16 %v530, %v530
        %vm536 = vcmask 519168
        %537 = vst.msk [vmem:[#allocation3] sm:$0xf] %vm536, %v535
        %s538 = scalar_lea.vmem %s4, 4
        %v539 = vld [vmem:[%s538] sm:$0xf]
        %v540 = vld [vmem:[%s289 + $0x4] sm:$0xf]
        %v541 = vld [vmem:[%s5 + $0x8] sm:$0xff]
        %543 = vset.pattern.permute.xlu0 0
        %544 = vperm.xlu0 %543, %v541
        %v545 = vpop.permute.xlu0 %544
        %v548 = vsel %vm487, %v539, 0
        %v551 = vsel %vm491, %v540, 0
        %553 = vmatprep.subr.bf16.mxu0 0
        %554 = vmatpush1.bf16.msra.mxu0 %v551
        %555 = vmatprep.subr.bf16.mxu0 0
        %556 = vmatpush1.bf16.msra.mxu0 0
        %557 = vmatprep.subr.bf16.mxu0 0
        %558 = vmatpush1.bf16.msra.mxu0 0
        %559 = vmatprep.subr.bf16.mxu0 0
        %560 = vmatpush1.bf16.msra.mxu0 0
        %561 = vmatprep.subr.bf16.mxu0 0
        %562 = vmatpush1.bf16.msra.mxu0 0
        %563 = vmatprep.subr.bf16.mxu0 0
        %564 = vmatpush1.bf16.msra.mxu0 0
        %565 = vmatprep.subr.bf16.mxu0 0
        %566 = vmatpush1.bf16.msra.mxu0 0
        %567 = vmatprep.subr.bf16.mxu0 0
        %568 = vmatpush1.bf16.msra.mxu0 0
        %569 = vmatprep.subr.bf16.mxu0 0
        %570 = vmatpush1.bf16.msra.mxu0 0
        %571 = vmatprep.subr.bf16.mxu0 0
        %572 = vmatpush1.bf16.msra.mxu0 0
        %573 = vmatprep.subr.bf16.mxu0 0
        %574 = vmatpush1.bf16.msra.mxu0 0
        %575 = vmatprep.subr.bf16.mxu0 0
        %576 = vmatpush1.bf16.msra.mxu0 0
        %577 = vmatprep.subr.bf16.mxu0 0
        %578 = vmatpush1.bf16.msra.mxu0 0
        %579 = vmatprep.subr.bf16.mxu0 0
        %580 = vmatpush1.bf16.msra.mxu0 0
        %581 = vmatprep.subr.bf16.mxu0 0
        %582 = vmatpush1.bf16.msra.mxu0 0
        %583 = vmatprep.subr.bf16.mxu0 0
        %584 = vmatpush1.bf16.msra.mxu0 0
        %585 = vmatprep.mubr.bf16.mxu0 0
        %586 = vmatmul.mubr.bf16.gmra.mrb[0].mxu0 %v548
        %v587 = vpop.f32.mrb[0].mxu0
        %v588 = vadd.f32 %v545, %v587
        %v589 = vpop.f32.mrb[0].mxu0
        %v590 = vpop.f32.mrb[0].mxu0
        %v591 = vpop.f32.mrb[0].mxu0
        %592 = vdwg.mxu0
        %v593 = vpack.c.bf16 %v588, %v588
        %v595 = vrot.slane %v593, 4
        %vm597 = vcmask 523268
        %598 = vst.msk [vmem:[#allocation3] sm:$0xf0] %vm597, %v595
        %s599 = scalar_lea.vmem %s4, 8
        %v600 = vld [vmem:[%s599] sm:$0xf]
        %v601 = vld [vmem:[%s289 + $0x8] sm:$0xf]
        %v602 = vld [vmem:[%s5 + $0x10] sm:$0xff]
        %604 = vset.pattern.permute.xlu0 0
        %605 = vperm.xlu0 %604, %v602
        %v606 = vpop.permute.xlu0 %605
        %v609 = vsel %vm487, %v600, 0
        %v612 = vsel %vm491, %v601, 0
        %614 = vmatprep.subr.bf16.mxu0 0
        %615 = vmatpush1.bf16.msra.mxu0 %v612
        %616 = vmatprep.subr.bf16.mxu0 0
        %617 = vmatpush1.bf16.msra.mxu0 0
        %618 = vmatprep.subr.bf16.mxu0 0
        %619 = vmatpush1.bf16.msra.mxu0 0
        %620 = vmatprep.subr.bf16.mxu0 0
        %621 = vmatpush1.bf16.msra.mxu0 0
        %622 = vmatprep.subr.bf16.mxu0 0
        %623 = vmatpush1.bf16.msra.mxu0 0
        %624 = vmatprep.subr.bf16.mxu0 0
        %625 = vmatpush1.bf16.msra.mxu0 0
        %626 = vmatprep.subr.bf16.mxu0 0
        %627 = vmatpush1.bf16.msra.mxu0 0
        %628 = vmatprep.subr.bf16.mxu0 0
        %629 = vmatpush1.bf16.msra.mxu0 0
        %630 = vmatprep.subr.bf16.mxu0 0
        %631 = vmatpush1.bf16.msra.mxu0 0
        %632 = vmatprep.subr.bf16.mxu0 0
        %633 = vmatpush1.bf16.msra.mxu0 0
        %634 = vmatprep.subr.bf16.mxu0 0
        %635 = vmatpush1.bf16.msra.mxu0 0
        %636 = vmatprep.subr.bf16.mxu0 0
        %637 = vmatpush1.bf16.msra.mxu0 0
        %638 = vmatprep.subr.bf16.mxu0 0
        %639 = vmatpush1.bf16.msra.mxu0 0
        %640 = vmatprep.subr.bf16.mxu0 0
        %641 = vmatpush1.bf16.msra.mxu0 0
        %642 = vmatprep.subr.bf16.mxu0 0
        %643 = vmatpush1.bf16.msra.mxu0 0
        %644 = vmatprep.subr.bf16.mxu0 0
        %645 = vmatpush1.bf16.msra.mxu0 0
        %646 = vmatprep.mubr.bf16.mxu0 0
        %647 = vmatmul.mubr.bf16.gmra.mrb[0].mxu0 %v609
        %v648 = vpop.f32.mrb[0].mxu0
        %v649 = vadd.f32 %v606, %v648
        %v650 = vpop.f32.mrb[0].mxu0
        %v651 = vpop.f32.mrb[0].mxu0
        %v652 = vpop.f32.mrb[0].mxu0
        %653 = vdwg.mxu0
        %v654 = vpack.c.bf16 %v649, %v649
        %655 = vst.msk [vmem:[#allocation3 + $0x8] sm:$0xf] %vm536, %v654
        %s656 = scalar_lea.vmem %s4, 12
        %v657 = vld [vmem:[%s656] sm:$0xf]
        %v658 = vld [vmem:[%s289 + $0xc] sm:$0xf]
        %v659 = vld [vmem:[%s5 + $0x18] sm:$0xff]
        %661 = vset.pattern.permute.xlu0 0
        %662 = vperm.xlu0 %661, %v659
        %v663 = vpop.permute.xlu0 %662
        %v666 = vsel %vm487, %v657, 0
        %v669 = vsel %vm491, %v658, 0
        %671 = vmatprep.subr.bf16.mxu0 0
        %672 = vmatpush1.bf16.msra.mxu0 %v669
        %673 = vmatprep.subr.bf16.mxu0 0
        %674 = vmatpush1.bf16.msra.mxu0 0
        %675 = vmatprep.subr.bf16.mxu0 0
        %676 = vmatpush1.bf16.msra.mxu0 0
        %677 = vmatprep.subr.bf16.mxu0 0
        %678 = vmatpush1.bf16.msra.mxu0 0
        %679 = vmatprep.subr.bf16.mxu0 0
        %680 = vmatpush1.bf16.msra.mxu0 0
        %681 = vmatprep.subr.bf16.mxu0 0
        %682 = vmatpush1.bf16.msra.mxu0 0
        %683 = vmatprep.subr.bf16.mxu0 0
        %684 = vmatpush1.bf16.msra.mxu0 0
        %685 = vmatprep.subr.bf16.mxu0 0
        %686 = vmatpush1.bf16.msra.mxu0 0
        %687 = vmatprep.subr.bf16.mxu0 0
        %688 = vmatpush1.bf16.msra.mxu0 0
        %689 = vmatprep.subr.bf16.mxu0 0
        %690 = vmatpush1.bf16.msra.mxu0 0
        %691 = vmatprep.subr.bf16.mxu0 0
        %692 = vmatpush1.bf16.msra.mxu0 0
        %693 = vmatprep.subr.bf16.mxu0 0
        %694 = vmatpush1.bf16.msra.mxu0 0
        %695 = vmatprep.subr.bf16.mxu0 0
        %696 = vmatpush1.bf16.msra.mxu0 0
        %697 = vmatprep.subr.bf16.mxu0 0
        %698 = vmatpush1.bf16.msra.mxu0 0
        %699 = vmatprep.subr.bf16.mxu0 0
        %700 = vmatpush1.bf16.msra.mxu0 0
        %701 = vmatprep.subr.bf16.mxu0 0
        %702 = vmatpush1.bf16.msra.mxu0 0
        %703 = vmatprep.mubr.bf16.mxu0 0
        %704 = vmatmul.mubr.bf16.gmra.mrb[0].mxu0 %v666
        %v705 = vpop.f32.mrb[0].mxu0
        %v706 = vadd.f32 %v663, %v705
        %v707 = vpop.f32.mrb[0].mxu0
        %v708 = vpop.f32.mrb[0].mxu0
        %v709 = vpop.f32.mrb[0].mxu0
        %710 = vdwg.mxu0
        %v711 = vpack.c.bf16 %v706, %v706
        %v713 = vrot.slane %v711, 4
        %715 = vst.msk [vmem:[#allocation3 + $0x8] sm:$0xf0] %vm597, %v713
        %v716 = vld [vmem:[#allocation3] sm:$0xf]
        %v717 = vld [vmem:[#allocation2 + $0x10] sm:$0xf]
        %v718 = vld [vmem:[#allocation2] sm:$0xf]
        %719 = vxpose.xlu0.c.b16.start [1/8] %v717, 128
        %720 = vxpose.xlu0.c.b16.cont [2/8] 0, 128
        %721 = vxpose.xlu0.c.b16.cont [3/8] 0, 128
        %722 = vxpose.xlu0.c.b16.cont [4/8] 0, 128
        %723 = vxpose.xlu0.c.b16.cont [5/8] 0, 128
        %724 = vxpose.xlu0.c.b16.cont [6/8] 0, 128
        %725 = vxpose.xlu0.c.b16.cont [7/8] 0, 128
        %726 = vxpose.xlu0.c.b16.end [8/8] 0, 128
        %v727 = vpop.trf.xlu0
        %v728 = vpop.trf.xlu0
        %v729 = vpop.trf.xlu0
        %v730 = vpop.trf.xlu0
        %v731 = vpop.trf.xlu0
        %v732 = vpop.trf.xlu0
        %v733 = vpop.trf.xlu0
        %v734 = vpop.trf.xlu0
        %v736 = vsel %vm487, %v727, 0
        %v739 = vsel %vm491, %v716, 0
        %741 = vmatprep.subr.bf16.mxu0 0
        %742 = vmatpush1.bf16.msra.mxu0 %v739
        %743 = vmatprep.subr.bf16.mxu0 0
        %744 = vmatpush1.bf16.msra.mxu0 0
        %745 = vmatprep.subr.bf16.mxu0 0
        %746 = vmatpush1.bf16.msra.mxu0 0
        %747 = vmatprep.subr.bf16.mxu0 0
        %748 = vmatpush1.bf16.msra.mxu0 0
        %749 = vmatprep.subr.bf16.mxu0 0
        %750 = vmatpush1.bf16.msra.mxu0 0
        %751 = vmatprep.subr.bf16.mxu0 0
        %752 = vmatpush1.bf16.msra.mxu0 0
        %753 = vmatprep.subr.bf16.mxu0 0
        %754 = vmatpush1.bf16.msra.mxu0 0
        %755 = vmatprep.subr.bf16.mxu0 0
        %756 = vmatpush1.bf16.msra.mxu0 0
        %757 = vmatprep.subr.bf16.mxu0 0
        %758 = vmatpush1.bf16.msra.mxu0 0
        %759 = vmatprep.subr.bf16.mxu0 0
        %760 = vmatpush1.bf16.msra.mxu0 0
        %761 = vmatprep.subr.bf16.mxu0 0
        %762 = vmatpush1.bf16.msra.mxu0 0
        %763 = vmatprep.subr.bf16.mxu0 0
        %764 = vmatpush1.bf16.msra.mxu0 0
        %765 = vmatprep.subr.bf16.mxu0 0
        %766 = vmatpush1.bf16.msra.mxu0 0
        %767 = vmatprep.subr.bf16.mxu0 0
        %768 = vmatpush1.bf16.msra.mxu0 0
        %769 = vmatprep.subr.bf16.mxu0 0
        %770 = vmatpush1.bf16.msra.mxu0 0
        %771 = vmatprep.subr.bf16.mxu0 0
        %772 = vmatpush1.bf16.msra.mxu0 0
        %773 = vmatprep.mubr.bf16.mxu0 0
        %774 = vmatmul.mubr.bf16.gmra.mrb[0].mxu0 %v736
        %v775 = vpop.f32.mrb[0].mxu0
        %v776 = vadd.f32 0.0, %v775
        %v777 = vpop.f32.mrb[0].mxu0
        %v778 = vpop.f32.mrb[0].mxu0
        %v779 = vpop.f32.mrb[0].mxu0
        %780 = vdwg.mxu0
        %vm781 = vcmask 523264
        %v782 = vsel %vm781, %v776, -inf
        %v783 = vrot.slane %v782, 4
        %v784 = vmax.f32 %v782, %v783
        %v785 = vrot.slane %v784, 2
        %v786 = vmax.f32 %v784, %v785
        %v787 = vrot.slane %v786, 1
        %v788 = vmax.f32 %v786, %v787
        %v789 = vsub.f32 %v776, %v788
        %v790 = vmul.f32 %v789, 1.442695
        %v791 = vpow.pop %v790
        %v792 = vsel %vm781, %v791, 0.0
        %v793 = vrot.slane %v792, 4
        %v794 = vadd.f32 %v792, %v793
        %v795 = vrot.slane %v794, 2
        %v796 = vadd.f32 %v794, %v795
        %v797 = vrot.slane %v796, 1
        %v798 = vadd.f32 %v796, %v797
        %v799 = vrcp.pop %v798
        %v800 = vmul.f32 %v791, %v799
        %v801 = vpack.c.bf16 %v800, %v800
        %v803 = vsel %vm487, %v718, 0
        %v806 = vsel %vm491, %v801, 0
        %808 = vmatprep.subr.bf16.mxu0 0
        %809 = vmatpush1.bf16.msra.mxu0 %v806
        %810 = vmatprep.subr.bf16.mxu0 0
        %811 = vmatpush1.bf16.msra.mxu0 0
        %812 = vmatprep.subr.bf16.mxu0 0
        %813 = vmatpush1.bf16.msra.mxu0 0
        %814 = vmatprep.subr.bf16.mxu0 0
        %815 = vmatpush1.bf16.msra.mxu0 0
        %816 = vmatprep.subr.bf16.mxu0 0
        %817 = vmatpush1.bf16.msra.mxu0 0
        %818 = vmatprep.subr.bf16.mxu0 0
        %819 = vmatpush1.bf16.msra.mxu0 0
        %820 = vmatprep.subr.bf16.mxu0 0
        %821 = vmatpush1.bf16.msra.mxu0 0
        %822 = vmatprep.subr.bf16.mxu0 0
        %823 = vmatpush1.bf16.msra.mxu0 0
        %824 = vmatprep.subr.bf16.mxu0 0
        %825 = vmatpush1.bf16.msra.mxu0 0
        %826 = vmatprep.subr.bf16.mxu0 0
        %827 = vmatpush1.bf16.msra.mxu0 0
        %828 = vmatprep.subr.bf16.mxu0 0
        %829 = vmatpush1.bf16.msra.mxu0 0
        %830 = vmatprep.subr.bf16.mxu0 0
        %831 = vmatpush1.bf16.msra.mxu0 0
        %832 = vmatprep.subr.bf16.mxu0 0
        %833 = vmatpush1.bf16.msra.mxu0 0
        %834 = vmatprep.subr.bf16.mxu0 0
        %835 = vmatpush1.bf16.msra.mxu0 0
        %836 = vmatprep.subr.bf16.mxu0 0
        %837 = vmatpush1.bf16.msra.mxu0 0
        %838 = vmatprep.subr.bf16.mxu0 0
        %839 = vmatpush1.bf16.msra.mxu0 0
        %840 = vmatprep.mubr.bf16.mxu0 0
        %841 = vmatmul.mubr.bf16.gmra.mrb[0].mxu0 %v803
        %v842 = vpop.f32.mrb[0].mxu0
        %v843 = vadd.f32 0.0, %v842
        %v844 = vpop.f32.mrb[0].mxu0
        %v845 = vpop.f32.mrb[0].mxu0
        %v846 = vpop.f32.mrb[0].mxu0
        %847 = vdwg.mxu0
        %v848 = vld [vmem:[%s289] sm:$0xf]
        %v849 = vunpack.c.l.bf16 %v848
        %v850 = vadd.f32 %v849, %v843
        %851 = vst.msk [vmem:[%s281] sm:$0xff] %vm781, %v850
        %v852 = vld [vmem:[#allocation3] sm:$0xf0]
        %v853 = vld [vmem:[#allocation2 + $0x10] sm:$0xf0]
        %v854 = vld [vmem:[#allocation2] sm:$0xf0]
        %v856 = vrot.slane %v853, 4
        %858 = vxpose.xlu0.c.b16.start [1/8] %v856, 128
        %859 = vxpose.xlu0.c.b16.cont [2/8] 0, 128
        %860 = vxpose.xlu0.c.b16.cont [3/8] 0, 128
        %861 = vxpose.xlu0.c.b16.cont [4/8] 0, 128
        %862 = vxpose.xlu0.c.b16.cont [5/8] 0, 128
        %863 = vxpose.xlu0.c.b16.cont [6/8] 0, 128
        %864 = vxpose.xlu0.c.b16.cont [7/8] 0, 128
        %865 = vxpose.xlu0.c.b16.end [8/8] 0, 128
        %v866 = vpop.trf.xlu0
        %v867 = vpop.trf.xlu0
        %v868 = vpop.trf.xlu0
        %v869 = vpop.trf.xlu0
        %v870 = vpop.trf.xlu0
        %v871 = vpop.trf.xlu0
        %v872 = vpop.trf.xlu0
        %v873 = vpop.trf.xlu0
        %v875 = vrot.slane %v852, 4
        %v877 = vsel %vm487, %v866, 0
        %v880 = vsel %vm491, %v875, 0
        %882 = vmatprep.subr.bf16.mxu0 0
        %883 = vmatpush1.bf16.msra.mxu0 %v880
        %884 = vmatprep.subr.bf16.mxu0 0
        %885 = vmatpush1.bf16.msra.mxu0 0
        %886 = vmatprep.subr.bf16.mxu0 0
        %887 = vmatpush1.bf16.msra.mxu0 0
        %888 = vmatprep.subr.bf16.mxu0 0
        %889 = vmatpush1.bf16.msra.mxu0 0
        %890 = vmatprep.subr.bf16.mxu0 0
        %891 = vmatpush1.bf16.msra.mxu0 0
        %892 = vmatprep.subr.bf16.mxu0 0
        %893 = vmatpush1.bf16.msra.mxu0 0
        %894 = vmatprep.subr.bf16.mxu0 0
        %895 = vmatpush1.bf16.msra.mxu0 0
        %896 = vmatprep.subr.bf16.mxu0 0
        %897 = vmatpush1.bf16.msra.mxu0 0
        %898 = vmatprep.subr.bf16.mxu0 0
        %899 = vmatpush1.bf16.msra.mxu0 0
        %900 = vmatprep.subr.bf16.mxu0 0
        %901 = vmatpush1.bf16.msra.mxu0 0
        %902 = vmatprep.subr.bf16.mxu0 0
        %903 = vmatpush1.bf16.msra.mxu0 0
        %904 = vmatprep.subr.bf16.mxu0 0
        %905 = vmatpush1.bf16.msra.mxu0 0
        %906 = vmatprep.subr.bf16.mxu0 0
        %907 = vmatpush1.bf16.msra.mxu0 0
        %908 = vmatprep.subr.bf16.mxu0 0
        %909 = vmatpush1.bf16.msra.mxu0 0
        %910 = vmatprep.subr.bf16.mxu0 0
        %911 = vmatpush1.bf16.msra.mxu0 0
        %912 = vmatprep.subr.bf16.mxu0 0
        %913 = vmatpush1.bf16.msra.mxu0 0
        %914 = vmatprep.mubr.bf16.mxu0 0
        %915 = vmatmul.mubr.bf16.gmra.mrb[0].mxu0 %v877
        %v916 = vpop.f32.mrb[0].mxu0
        %v917 = vadd.f32 0.0, %v916
        %v918 = vpop.f32.mrb[0].mxu0
        %v919 = vpop.f32.mrb[0].mxu0
        %v920 = vpop.f32.mrb[0].mxu0
        %921 = vdwg.mxu0
        %v922 = vsel %vm781, %v917, -inf
        %v923 = vrot.slane %v922, 4
        %v924 = vmax.f32 %v922, %v923
        %v925 = vrot.slane %v924, 2
        %v926 = vmax.f32 %v924, %v925
        %v927 = vrot.slane %v926, 1
        %v928 = vmax.f32 %v926, %v927
        %v929 = vsub.f32 %v917, %v928
        %v930 = vmul.f32 %v929, 1.442695
        %v931 = vpow.pop %v930
        %v932 = vsel %vm781, %v931, 0.0
        %v933 = vrot.slane %v932, 4
        %v934 = vadd.f32 %v932, %v933
        %v935 = vrot.slane %v934, 2
        %v936 = vadd.f32 %v934, %v935
        %v937 = vrot.slane %v936, 1
        %v938 = vadd.f32 %v936, %v937
        %v939 = vrcp.pop %v938
        %v940 = vmul.f32 %v931, %v939
        %v941 = vpack.c.bf16 %v940, %v940
        %v943 = vrot.slane %v854, 4
        %v945 = vsel %vm487, %v943, 0
        %v948 = vsel %vm491, %v941, 0
        %950 = vmatprep.subr.bf16.mxu0 0
        %951 = vmatpush1.bf16.msra.mxu0 %v948
        %952 = vmatprep.subr.bf16.mxu0 0
        %953 = vmatpush1.bf16.msra.mxu0 0
        %954 = vmatprep.subr.bf16.mxu0 0
        %955 = vmatpush1.bf16.msra.mxu0 0
        %956 = vmatprep.subr.bf16.mxu0 0
        %957 = vmatpush1.bf16.msra.mxu0 0
        %958 = vmatprep.subr.bf16.mxu0 0
        %959 = vmatpush1.bf16.msra.mxu0 0
        %960 = vmatprep.subr.bf16.mxu0 0
        %961 = vmatpush1.bf16.msra.mxu0 0
        %962 = vmatprep.subr.bf16.mxu0 0
        %963 = vmatpush1.bf16.msra.mxu0 0
        %964 = vmatprep.subr.bf16.mxu0 0
        %965 = vmatpush1.bf16.msra.mxu0 0
        %966 = vmatprep.subr.bf16.mxu0 0
        %967 = vmatpush1.bf16.msra.mxu0 0
        %968 = vmatprep.subr.bf16.mxu0 0
        %969 = vmatpush1.bf16.msra.mxu0 0
        %970 = vmatprep.subr.bf16.mxu0 0
        %971 = vmatpush1.bf16.msra.mxu0 0
        %972 = vmatprep.subr.bf16.mxu0 0
        %973 = vmatpush1.bf16.msra.mxu0 0
        %974 = vmatprep.subr.bf16.mxu0 0
        %975 = vmatpush1.bf16.msra.mxu0 0
        %976 = vmatprep.subr.bf16.mxu0 0
        %977 = vmatpush1.bf16.msra.mxu0 0
        %978 = vmatprep.subr.bf16.mxu0 0
        %979 = vmatpush1.bf16.msra.mxu0 0
        %980 = vmatprep.subr.bf16.mxu0 0
        %981 = vmatpush1.bf16.msra.mxu0 0
        %982 = vmatprep.mubr.bf16.mxu0 0
        %983 = vmatmul.mubr.bf16.gmra.mrb[0].mxu0 %v945
        %v984 = vpop.f32.mrb[0].mxu0
        %v985 = vadd.f32 0.0, %v984
        %v986 = vpop.f32.mrb[0].mxu0
        %v987 = vpop.f32.mrb[0].mxu0
        %v988 = vpop.f32.mrb[0].mxu0
        %989 = vdwg.mxu0
        %v990 = vld [vmem:[%s289 + $0x4] sm:$0xf]
        %v991 = vunpack.c.l.bf16 %v990
        %v992 = vadd.f32 %v991, %v985
        %993 = vst.msk [vmem:[%s281 + $0x8] sm:$0xff] %vm781, %v992
        %v994 = vld [vmem:[#allocation3 + $0x8] sm:$0xf]
        %v995 = vld [vmem:[#allocation2 + $0x18] sm:$0xf]
        %v996 = vld [vmem:[#allocation2 + $0x8] sm:$0xf]
        %997 = vxpose.xlu0.c.b16.start [1/8] %v995, 128
        %998 = vxpose.xlu0.c.b16.cont [2/8] 0, 128
        %999 = vxpose.xlu0.c.b16.cont [3/8] 0, 128
        %1000 = vxpose.xlu0.c.b16.cont [4/8] 0, 128
        %1001 = vxpose.xlu0.c.b16.cont [5/8] 0, 128
        %1002 = vxpose.xlu0.c.b16.cont [6/8] 0, 128
        %1003 = vxpose.xlu0.c.b16.cont [7/8] 0, 128
        %1004 = vxpose.xlu0.c.b16.end [8/8] 0, 128
        %v1005 = vpop.trf.xlu0
        %v1006 = vpop.trf.xlu0
        %v1007 = vpop.trf.xlu0
        %v1008 = vpop.trf.xlu0
        %v1009 = vpop.trf.xlu0
        %v1010 = vpop.trf.xlu0
        %v1011 = vpop.trf.xlu0
        %v1012 = vpop.trf.xlu0
        %v1014 = vsel %vm487, %v1005, 0
        %v1017 = vsel %vm491, %v994, 0
        %1019 = vmatprep.subr.bf16.mxu0 0
        %1020 = vmatpush1.bf16.msra.mxu0 %v1017
        %1021 = vmatprep.subr.bf16.mxu0 0
        %1022 = vmatpush1.bf16.msra.mxu0 0
        %1023 = vmatprep.subr.bf16.mxu0 0
        %1024 = vmatpush1.bf16.msra.mxu0 0
        %1025 = vmatprep.subr.bf16.mxu0 0
        %1026 = vmatpush1.bf16.msra.mxu0 0
        %1027 = vmatprep.subr.bf16.mxu0 0
        %1028 = vmatpush1.bf16.msra.mxu0 0
        %1029 = vmatprep.subr.bf16.mxu0 0
        %1030 = vmatpush1.bf16.msra.mxu0 0
        %1031 = vmatprep.subr.bf16.mxu0 0
        %1032 = vmatpush1.bf16.msra.mxu0 0
        %1033 = vmatprep.subr.bf16.mxu0 0
        %1034 = vmatpush1.bf16.msra.mxu0 0
        %1035 = vmatprep.subr.bf16.mxu0 0
        %1036 = vmatpush1.bf16.msra.mxu0 0
        %1037 = vmatprep.subr.bf16.mxu0 0
        %1038 = vmatpush1.bf16.msra.mxu0 0
        %1039 = vmatprep.subr.bf16.mxu0 0
        %1040 = vmatpush1.bf16.msra.mxu0 0
        %1041 = vmatprep.subr.bf16.mxu0 0
        %1042 = vmatpush1.bf16.msra.mxu0 0
        %1043 = vmatprep.subr.bf16.mxu0 0
        %1044 = vmatpush1.bf16.msra.mxu0 0
        %1045 = vmatprep.subr.bf16.mxu0 0
        %1046 = vmatpush1.bf16.msra.mxu0 0
        %1047 = vmatprep.subr.bf16.mxu0 0
        %1048 = vmatpush1.bf16.msra.mxu0 0
        %1049 = vmatprep.subr.bf16.mxu0 0
        %1050 = vmatpush1.bf16.msra.mxu0 0
        %1051 = vmatprep.mubr.bf16.mxu0 0
        %1052 = vmatmul.mubr.bf16.gmra.mrb[0].mxu0 %v1014
        %v1053 = vpop.f32.mrb[0].mxu0
        %v1054 = vadd.f32 0.0, %v1053
        %v1055 = vpop.f32.mrb[0].mxu0
        %v1056 = vpop.f32.mrb[0].mxu0
        %v1057 = vpop.f32.mrb[0].mxu0
        %1058 = vdwg.mxu0
        %v1059 = vsel %vm781, %v1054, -inf
        %v1060 = vrot.slane %v1059, 4
        %v1061 = vmax.f32 %v1059, %v1060
        %v1062 = vrot.slane %v1061, 2
        %v1063 = vmax.f32 %v1061, %v1062
        %v1064 = vrot.slane %v1063, 1
        %v1065 = vmax.f32 %v1063, %v1064
        %v1066 = vsub.f32 %v1054, %v1065
        %v1067 = vmul.f32 %v1066, 1.442695
        %v1068 = vpow.pop %v1067
        %v1069 = vsel %vm781, %v1068, 0.0
        %v1070 = vrot.slane %v1069, 4
        %v1071 = vadd.f32 %v1069, %v1070
        %v1072 = vrot.slane %v1071, 2
        %v1073 = vadd.f32 %v1071, %v1072
        %v1074 = vrot.slane %v1073, 1
        %v1075 = vadd.f32 %v1073, %v1074
        %v1076 = vrcp.pop %v1075
        %v1077 = vmul.f32 %v1068, %v1076
        %v1078 = vpack.c.bf16 %v1077, %v1077
        %v1080 = vsel %vm487, %v996, 0
        %v1083 = vsel %vm491, %v1078, 0
        %1085 = vmatprep.subr.bf16.mxu0 0
        %1086 = vmatpush1.bf16.msra.mxu0 %v1083
        %1087 = vmatprep.subr.bf16.mxu0 0
        %1088 = vmatpush1.bf16.msra.mxu0 0
        %1089 = vmatprep.subr.bf16.mxu0 0
        %1090 = vmatpush1.bf16.msra.mxu0 0
        %1091 = vmatprep.subr.bf16.mxu0 0
        %1092 = vmatpush1.bf16.msra.mxu0 0
        %1093 = vmatprep.subr.bf16.mxu0 0
        %1094 = vmatpush1.bf16.msra.mxu0 0
        %1095 = vmatprep.subr.bf16.mxu0 0
        %1096 = vmatpush1.bf16.msra.mxu0 0
        %1097 = vmatprep.subr.bf16.mxu0 0
        %1098 = vmatpush1.bf16.msra.mxu0 0
        %1099 = vmatprep.subr.bf16.mxu0 0
        %1100 = vmatpush1.bf16.msra.mxu0 0
        %1101 = vmatprep.subr.bf16.mxu0 0
        %1102 = vmatpush1.bf16.msra.mxu0 0
        %1103 = vmatprep.subr.bf16.mxu0 0
        %1104 = vmatpush1.bf16.msra.mxu0 0
        %1105 = vmatprep.subr.bf16.mxu0 0
        %1106 = vmatpush1.bf16.msra.mxu0 0
        %1107 = vmatprep.subr.bf16.mxu0 0
        %1108 = vmatpush1.bf16.msra.mxu0 0
        %1109 = vmatprep.subr.bf16.mxu0 0
        %1110 = vmatpush1.bf16.msra.mxu0 0
        %1111 = vmatprep.subr.bf16.mxu0 0
        %1112 = vmatpush1.bf16.msra.mxu0 0
        %1113 = vmatprep.subr.bf16.mxu0 0
        %1114 = vmatpush1.bf16.msra.mxu0 0
        %1115 = vmatprep.subr.bf16.mxu0 0
        %1116 = vmatpush1.bf16.msra.mxu0 0
        %1117 = vmatprep.mubr.bf16.mxu0 0
        %1118 = vmatmul.mubr.bf16.gmra.mrb[0].mxu0 %v1080
        %v1119 = vpop.f32.mrb[0].mxu0
        %v1120 = vadd.f32 0.0, %v1119
        %v1121 = vpop.f32.mrb[0].mxu0
        %v1122 = vpop.f32.mrb[0].mxu0
        %v1123 = vpop.f32.mrb[0].mxu0
        %1124 = vdwg.mxu0
        %v1125 = vld [vmem:[%s289 + $0x8] sm:$0xf]
        %v1126 = vunpack.c.l.bf16 %v1125
        %v1127 = vadd.f32 %v1126, %v1120
        %1128 = vst.msk [vmem:[%s281 + $0x10] sm:$0xff] %vm781, %v1127
        %v1129 = vld [vmem:[#allocation3 + $0x8] sm:$0xf0]
        %v1130 = vld [vmem:[#allocation2 + $0x18] sm:$0xf0]
        %v1131 = vld [vmem:[#allocation2 + $0x8] sm:$0xf0]
        %v1133 = vrot.slane %v1130, 4
        %1135 = vxpose.xlu0.c.b16.start [1/8] %v1133, 128
        %1136 = vxpose.xlu0.c.b16.cont [2/8] 0, 128
        %1137 = vxpose.xlu0.c.b16.cont [3/8] 0, 128
        %1138 = vxpose.xlu0.c.b16.cont [4/8] 0, 128
        %1139 = vxpose.xlu0.c.b16.cont [5/8] 0, 128
        %1140 = vxpose.xlu0.c.b16.cont [6/8] 0, 128
        %1141 = vxpose.xlu0.c.b16.cont [7/8] 0, 128
        %1142 = vxpose.xlu0.c.b16.end [8/8] 0, 128
        %v1143 = vpop.trf.xlu0
        %v1144 = vpop.trf.xlu0
        %v1145 = vpop.trf.xlu0
        %v1146 = vpop.trf.xlu0
        %v1147 = vpop.trf.xlu0
        %v1148 = vpop.trf.xlu0
        %v1149 = vpop.trf.xlu0
        %v1150 = vpop.trf.xlu0
        %v1152 = vrot.slane %v1129, 4
        %v1154 = vsel %vm487, %v1143, 0
        %v1157 = vsel %vm491, %v1152, 0
        %1159 = vmatprep.subr.bf16.mxu0 0
        %1160 = vmatpush1.bf16.msra.mxu0 %v1157
        %1161 = vmatprep.subr.bf16.mxu0 0
        %1162 = vmatpush1.bf16.msra.mxu0 0
        %1163 = vmatprep.subr.bf16.mxu0 0
        %1164 = vmatpush1.bf16.msra.mxu0 0
        %1165 = vmatprep.subr.bf16.mxu0 0
        %1166 = vmatpush1.bf16.msra.mxu0 0
        %1167 = vmatprep.subr.bf16.mxu0 0
        %1168 = vmatpush1.bf16.msra.mxu0 0
        %1169 = vmatprep.subr.bf16.mxu0 0
        %1170 = vmatpush1.bf16.msra.mxu0 0
        %1171 = vmatprep.subr.bf16.mxu0 0
        %1172 = vmatpush1.bf16.msra.mxu0 0
        %1173 = vmatprep.subr.bf16.mxu0 0
        %1174 = vmatpush1.bf16.msra.mxu0 0
        %1175 = vmatprep.subr.bf16.mxu0 0
        %1176 = vmatpush1.bf16.msra.mxu0 0
        %1177 = vmatprep.subr.bf16.mxu0 0
        %1178 = vmatpush1.bf16.msra.mxu0 0
        %1179 = vmatprep.subr.bf16.mxu0 0
        %1180 = vmatpush1.bf16.msra.mxu0 0
        %1181 = vmatprep.subr.bf16.mxu0 0
        %1182 = vmatpush1.bf16.msra.mxu0 0
        %1183 = vmatprep.subr.bf16.mxu0 0
        %1184 = vmatpush1.bf16.msra.mxu0 0
        %1185 = vmatprep.subr.bf16.mxu0 0
        %1186 = vmatpush1.bf16.msra.mxu0 0
        %1187 = vmatprep.subr.bf16.mxu0 0
        %1188 = vmatpush1.bf16.msra.mxu0 0
        %1189 = vmatprep.subr.bf16.mxu0 0
        %1190 = vmatpush1.bf16.msra.mxu0 0
        %1191 = vmatprep.mubr.bf16.mxu0 0
        %1192 = vmatmul.mubr.bf16.gmra.mrb[0].mxu0 %v1154
        %v1193 = vpop.f32.mrb[0].mxu0
        %v1194 = vadd.f32 0.0, %v1193
        %v1195 = vpop.f32.mrb[0].mxu0
        %v1196 = vpop.f32.mrb[0].mxu0
        %v1197 = vpop.f32.mrb[0].mxu0
        %1198 = vdwg.mxu0
        %v1199 = vsel %vm781, %v1194, -inf
        %v1200 = vrot.slane %v1199, 4
        %v1201 = vmax.f32 %v1199, %v1200
        %v1202 = vrot.slane %v1201, 2
        %v1203 = vmax.f32 %v1201, %v1202
        %v1204 = vrot.slane %v1203, 1
        %v1205 = vmax.f32 %v1203, %v1204
        %v1206 = vsub.f32 %v1194, %v1205
        %v1207 = vmul.f32 %v1206, 1.442695
        %v1208 = vpow.pop %v1207
        %v1209 = vsel %vm781, %v1208, 0.0
        %v1210 = vrot.slane %v1209, 4
        %v1211 = vadd.f32 %v1209, %v1210
        %v1212 = vrot.slane %v1211, 2
        %v1213 = vadd.f32 %v1211, %v1212
        %v1214 = vrot.slane %v1213, 1
        %v1215 = vadd.f32 %v1213, %v1214
        %v1216 = vrcp.pop %v1215
        %v1217 = vmul.f32 %v1208, %v1216
        %v1218 = vpack.c.bf16 %v1217, %v1217
        %v1220 = vrot.slane %v1131, 4
        %v1222 = vsel %vm487, %v1220, 0
        %v1225 = vsel %vm491, %v1218, 0
        %1227 = vmatprep.subr.bf16.mxu0 0
        %1228 = vmatpush1.bf16.msra.mxu0 %v1225
        %1229 = vmatprep.subr.bf16.mxu0 0
        %1230 = vmatpush1.bf16.msra.mxu0 0
        %1231 = vmatprep.subr.bf16.mxu0 0
        %1232 = vmatpush1.bf16.msra.mxu0 0
        %1233 = vmatprep.subr.bf16.mxu0 0
        %1234 = vmatpush1.bf16.msra.mxu0 0
        %1235 = vmatprep.subr.bf16.mxu0 0
        %1236 = vmatpush1.bf16.msra.mxu0 0
        %1237 = vmatprep.subr.bf16.mxu0 0
        %1238 = vmatpush1.bf16.msra.mxu0 0
        %1239 = vmatprep.subr.bf16.mxu0 0
        %1240 = vmatpush1.bf16.msra.mxu0 0
        %1241 = vmatprep.subr.bf16.mxu0 0
        %1242 = vmatpush1.bf16.msra.mxu0 0
        %1243 = vmatprep.subr.bf16.mxu0 0
        %1244 = vmatpush1.bf16.msra.mxu0 0
        %1245 = vmatprep.subr.bf16.mxu0 0
        %1246 = vmatpush1.bf16.msra.mxu0 0
        %1247 = vmatprep.subr.bf16.mxu0 0
        %1248 = vmatpush1.bf16.msra.mxu0 0
        %1249 = vmatprep.subr.bf16.mxu0 0
        %1250 = vmatpush1.bf16.msra.mxu0 0
        %1251 = vmatprep.subr.bf16.mxu0 0
        %1252 = vmatpush1.bf16.msra.mxu0 0
        %1253 = vmatprep.subr.bf16.mxu0 0
        %1254 = vmatpush1.bf16.msra.mxu0 0
        %1255 = vmatprep.subr.bf16.mxu0 0
        %1256 = vmatpush1.bf16.msra.mxu0 0
        %1257 = vmatprep.subr.bf16.mxu0 0
        %1258 = vmatpush1.bf16.msra.mxu0 0
        %1259 = vmatprep.mubr.bf16.mxu0 0
        %1260 = vmatmul.mubr.bf16.gmra.mrb[0].mxu0 %v1222
        %v1261 = vpop.f32.mrb[0].mxu0
        %v1262 = vadd.f32 0.0, %v1261
        %v1263 = vpop.f32.mrb[0].mxu0
        %v1264 = vpop.f32.mrb[0].mxu0
        %v1265 = vpop.f32.mrb[0].mxu0
        %1266 = vdwg.mxu0
        %v1267 = vld [vmem:[%s289 + $0xc] sm:$0xf]
        %v1268 = vunpack.c.l.bf16 %v1267
        %v1269 = vadd.f32 %v1268, %v1262
        %1270 = vst.msk [vmem:[%s281 + $0x18] sm:$0xff] %vm781, %v1269
        %s1271 = sand.u32 %s180, 1
        %s1272 = scalar_lea.sflag [#allocation5], %s1271
        %s1273 = sand.u32 %s180, 1
        %s1274 = smul.addr %s1273, 32
        %s1275 = scalar_lea.vmem [#allocation4], %s1274
        // Predicated region
        $region49: #{tpu_custom_call.1} parent=43 // pred_check
          %p1276 = pneg %p190
        $region50: #{tpu_custom_call.1} parent=43 // pred_check_branch
          %1278 = sbr.rel (%p1276) target = $region52
        $region51: #{tpu_custom_call.1} parent=43 // pred_region
          %s1280 = ssub.s32 512, 512
          %1281 = vsyncadd %s1272, %s1280
          %s1282 = smul.addr %s24, 4
          %s1283 = sadd.s32 %s25, %s1282
          %s1284 = smul.addr %s1283, 128
          %s1285 = scalar_lea.hbm %s6, %s1284
          %s1286 = sshll.u32 %s1275, 4
          %s1287 = int_to_ptr.vmem [resolvable:$true] %s1286
          %1292 = dma.vmem_to_hbm [thread:$0]  %s1287, 512, %s1285, %s1272, 128, 128, 8
        $region52: #{tpu_custom_call.1} parent=43 // pred_fallthru
          _
      $region44: #{tpu_custom_call.1} parent=5 // pred_fallthru
        _
      %p1293 = scmp.le.s32.totalorder 2, %s15
      // Predicated region
      $region53: #{tpu_custom_call.1} parent=5 // pred_check
        %p1294 = pneg %p1293
      $region54: #{tpu_custom_call.1} parent=5 // pred_check_branch
        %1296 = sbr.rel (%p1294) target = $region56
      $region55: #{tpu_custom_call.1} parent=5 // pred_region
        %s1297 = ssub.s32 %s15, 2
        // Predicated region
        $region57: #{tpu_custom_call.1} parent=55 // pred_check
          %p1298 = pneg %p196
        $region58: #{tpu_custom_call.1} parent=55 // pred_check_branch
          %1300 = sbr.rel (%p1298) target = $region60
        $region59: #{tpu_custom_call.1} parent=55 // pred_region
          %s1301 = sand.u32 %s181, 1
          %s1302 = scalar_lea.sflag [#allocation5], %s1301
          %s1303 = sand.u32 %s181, 1
          %s1304 = smul.addr %s1303, 32
          %s1305 = scalar_lea.vmem [#allocation4], %s1304
          %1306 = dma.done %s1302, 512
        $region60: #{tpu_custom_call.1} parent=55 // pred_fallthru
          _
      $region56: #{tpu_custom_call.1} parent=5 // pred_fallthru
        _
    $region6: #{tpu_custom_call.1} parent=1 // loop_footer
      %s19 = sadd.s32 1, %s15
    $region7: #{tpu_custom_call.1} parent=1 // loop_footer_branch
      %14 = sbr.rel target = $region3
    $region8: #{tpu_custom_call.1} parent=1 // loop_exit
      _
    %1307 = vsyncpa [#allocation5], 1
    %s1308 = scalar_lea.sflag [#allocation5], 1
    %1309 = vsyncpa %s1308, 1

</llo_original>
